<compile_context>
chip_gen: v7x
topology: tpu7x:2x2x1
jax: 0.10.0
libtpu: 0.0.40
codegen_flags: <defaults>
</compile_context>

<pallas_src>
import math
import functools

import jax
import jax.numpy as jnp
from jax.experimental import pallas as pl
from jax.experimental.pallas import tpu as pltpu


# Explicit scoped-VMEM budget: above the 16/32 MiB defaults, below physical on
# v5e (128 MiB), v6e (128 MiB) and v7x (64 MiB per TC).
_VMEM_LIMIT_BYTES = 48 * 1024 * 1024


def _compiler_params():
    return pltpu.CompilerParams(
        dimension_semantics=("parallel",),      # row tiles are independent -> megacore-shardable
        vmem_limit_bytes=_VMEM_LIMIT_BYTES,
    )


def _choose_tm(n, adj_bytes_per_elem=2, vmem_budget=24 * 1024 * 1024):
    """Row-tile size: as large as possible while double-buffered bf16 adj row
    tiles (2 * tm * n * 2B) stay inside a conservative VMEM budget."""
    cap = max(8, vmem_budget // (2 * n * adj_bytes_per_elem))
    tm = min(1024, n, cap)
    if tm >= n:
        return n
    return max(8, (tm // 8) * 8)   # second-minor block dim must be a multiple of 8 (or == n)


# --------------------------------------------------------------------------- #
# Kernels
# --------------------------------------------------------------------------- #
def _gc1_kernel(adj_ref, x_ref, w1_ref, b1_ref, w2_ref, h1_ref, s2_ref):
    adj = adj_ref[...].astype(jnp.float32)          # bf16 tile -> f32, f32 accumulation below
    # gc1 reassociated: (adj @ x) @ W1  (exact by associativity; contracts adj
    # against the narrower nfeat dim and keeps only x resident).
    t = jnp.dot(adj, x_ref[...], preferred_element_type=jnp.float32)
    h1 = jnp.maximum(
        jnp.dot(t, w1_ref[...], preferred_element_type=jnp.float32) + b1_ref[...], 0.0)
    # TODO(synk): dropout is eval-mode identity; training mode would need
    # pltpu.prng_seed / pltpu.prng_random_bits masking + 1/(1-p) rescale.
    h1_ref[...] = h1
    # Support for gc2, fused here so pass 2 streams adj against a [N, nhid] resident operand.
    s2_ref[...] = jnp.dot(h1, w2_ref[...], preferred_element_type=jnp.float32)


def _gc2_kernel(adj_ref, s2_ref, b2_ref, w3_ref, h2_ref, s3_ref):
    adj = adj_ref[...].astype(jnp.float32)
    h2 = jnp.maximum(
        jnp.dot(adj, s2_ref[...], preferred_element_type=jnp.float32) + b2_ref[...], 0.0)
    h2_ref[...] = h2
    # Support for gc3 (adj @ (h2 @ W3) association kept, as in the module).
    s3_ref[...] = jnp.dot(h2, w3_ref[...], preferred_element_type=jnp.float32)


def _gc3_head_kernel(nclass, adj_ref, s3_ref, b3_ref, h1_ref, h2_ref,
                     wl1_ref, wl2_ref, wl3_ref, bl_ref, out_ref):
    adj = adj_ref[...].astype(jnp.float32)
    h3 = jnp.dot(adj, s3_ref[...], preferred_element_type=jnp.float32) + b3_ref[...]
    # lin(cat(h1, h2, h3)) == h1 @ Wl[:nhid] + h2 @ Wl[nhid:2nhid] + h3 @ Wl[2nhid:]
    logits = (jnp.dot(h1_ref[...], wl1_ref[...], preferred_element_type=jnp.float32)
              + jnp.dot(h2_ref[...], wl2_ref[...], preferred_element_type=jnp.float32)
              + jnp.dot(h3, wl3_ref[...], preferred_element_type=jnp.float32)
              + bl_ref[...])
    # log_softmax over the first `nclass` lanes only; remaining lanes are padding
    # kept solely for an unmasked 128-lane output store (sliced off outside).
    lane = jax.lax.broadcasted_iota(jnp.int32, logits.shape, dimension=1)
    masked = jnp.where(lane < nclass, logits, -jnp.inf)
    m = jnp.max(masked, axis=1, keepdims=True)
    lse = jnp.log(jnp.sum(jnp.exp(masked - m), axis=1, keepdims=True))
    out_ref[...] = logits - m - lse


# --------------------------------------------------------------------------- #
# Wrapper
# --------------------------------------------------------------------------- #
@functools.partial(jax.jit, static_argnames=("tm",))
def gcn_synthetic_forward(x, adj, params, *, tm=None):
    """GCNSynthetic forward: three row-tiled, pipelined Pallas passes over adj."""
    n, nfeat = x.shape
    nhid = params["w1"].shape[1]
    nout = params["w3"].shape[1]
    nclass = params["bl"].shape[-1]
    ncp = 128 * pl.cdiv(nclass, 128)                 # lane-dense padded class dim

    if tm is None:
        tm = _choose_tm(n)
    grid = (pl.cdiv(n, tm),)                         # OOB rows of the last tile are dropped
    cp = _compiler_params()
    f32 = jnp.float32

    adj_bf16 = adj.astype(jnp.bfloat16)              # dominant HBM stream: halve its bytes

    def rows(width):                                 # row-tiled operand [n, width]
        return pl.BlockSpec((tm, width), lambda i: (i, 0))

    def full(shape):                                 # VMEM-resident operand, DMA'd once
        return pl.BlockSpec(shape, lambda i: (0,) * len(shape))

    adj_bytes = n * n * 2

    # ---- pass 1: gc1 (+ support for gc2) ------------------------------------
    h1, s2 = pl.pallas_call(
        _gc1_kernel,
        grid=grid,
        in_specs=[rows(n), full((n, nfeat)), full((nfeat, nhid)),
                  full((1, nhid)), full((nhid, nhid))],
        out_specs=(rows(nhid), rows(nhid)),
        out_shape=(jax.ShapeDtypeStruct((n, nhid), f32),
                   jax.ShapeDtypeStruct((n, nhid), f32)),
        compiler_params=cp,
        cost_estimate=pl.CostEstimate(
            flops=int(2 * n * n * nfeat + 2 * n * nfeat * nhid + 2 * n * nhid * nhid),
            transcendentals=0,
            bytes_accessed=int(adj_bytes + 4 * (n * nfeat + 2 * n * nhid))),
    )(adj_bf16, x, params["w1"], params["b1"], params["w2"])

    # ---- pass 2: gc2 (+ support for gc3) ------------------------------------
    h2, s3 = pl.pallas_call(
        _gc2_kernel,
        grid=grid,
        in_specs=[rows(n), full((n, nhid)), full((1, nhid)), full((nhid, nout))],
        out_specs=(rows(nhid), rows(nout)),
        out_shape=(jax.ShapeDtypeStruct((n, nhid), f32),
                   jax.ShapeDtypeStruct((n, nout), f32)),
        compiler_params=cp,
        cost_estimate=pl.CostEstimate(
            flops=int(2 * n * n * nhid + 2 * n * nhid * nout),
            transcendentals=0,
            bytes_accessed=int(adj_bytes + 4 * (2 * n * nhid + n * nout))),
    )(adj_bf16, s2, params["b2"], params["w3"])

    # ---- pass 3: gc3 + linear head + log_softmax ----------------------------
    pad = ((0, 0), (0, ncp - nclass))                # lane-dense head weights / bias / output
    wl1p = jnp.pad(params["wl1"], pad)
    wl2p = jnp.pad(params["wl2"], pad)
    wl3p = jnp.pad(params["wl3"], pad)
    blp = jnp.pad(params["bl"], pad)

    out_padded = pl.pallas_call(
        functools.partial(_gc3_head_kernel, nclass),
        grid=grid,
        in_specs=[rows(n), full((n, nout)), full((1, nout)),
                  rows(nhid), rows(nhid),
                  full((nhid, ncp)), full((nhid, ncp)), full((nout, ncp)),
                  full((1, ncp))],
        out_specs=rows(ncp),
        out_shape=jax.ShapeDtypeStruct((n, ncp), f32),
        compiler_params=cp,
        cost_estimate=pl.CostEstimate(
            flops=int(2 * n * n * nout + 2 * n * (2 * nhid + nout) * ncp),
            transcendentals=int(n * ncp),
            bytes_accessed=int(adj_bytes + 4 * (n * nout + 2 * n * nhid + n * ncp))),
    )(adj_bf16, s3, params["b3"], h1, h2, wl1p, wl2p, wl3p, blp)

    return out_padded[:, :nclass]


# --------------------------------------------------------------------------- #
# Params init (mirrors the module's __init__ shapes) and pure-JAX reference
# --------------------------------------------------------------------------- #
def init_params(key, nfeat, nhid, nout, nclass):
    ks = jax.random.split(key, 8)

    def gcn_layer(kw, kb, fin, fout):
        stdv = 1.0 / math.sqrt(fout)
        w = jax.random.uniform(kw, (fin, fout), jnp.float32, -stdv, stdv)
        b = jax.random.uniform(kb, (1, fout), jnp.float32, -stdv, stdv)
        return w, b

    w1, b1 = gcn_layer(ks[0], ks[1], nfeat, nhid)
    w2, b2 = gcn_layer(ks[2], ks[3], nhid, nhid)
    w3, b3 = gcn_layer(ks[4], ks[5], nhid, nout)

    lin_in = nhid + nhid + nout
    bound = 1.0 / math.sqrt(lin_in)
    wl = jax.random.uniform(ks[6], (lin_in, nclass), jnp.float32, -bound, bound)
    bl = jax.random.uniform(ks[7], (1, nclass), jnp.float32, -bound, bound)

    return {
        "w1": w1, "b1": b1,
        "w2": w2, "b2": b2,
        "w3": w3, "b3": b3,
        "wl1": wl[:nhid], "wl2": wl[nhid:2 * nhid], "wl3": wl[2 * nhid:],
        "bl": bl,
    }


def _reference(x, adj, p):
    """Pure-JAX reference following the PyTorch module's op order."""
    h1 = jax.nn.relu(adj @ (x @ p["w1"]) + p["b1"])
    h2 = jax.nn.relu(adj @ (h1 @ p["w2"]) + p["b2"])
    h3 = adj @ (h2 @ p["w3"]) + p["b3"]
    cat = jnp.concatenate([h1, h2, h3], axis=1)
    wl = jnp.concatenate([p["wl1"], p["wl2"], p["wl3"]], axis=0)
    logits = cat @ wl + p["bl"]
    return jax.nn.log_softmax(logits, axis=1)


if __name__ == "__main__":
    # Small synthetic graph, consistent with the module's forward signature.
    N, nfeat, nhid, nout, nclass = 128, 16, 32, 16, 4

    key = jax.random.PRNGKey(0)
    k_x, k_adj, k_params = jax.random.split(key, 3)

    x = jax.random.normal(k_x, (N, nfeat), jnp.float32)

    # Symmetric normalized adjacency (with self loops), dense.
    a = (jax.random.uniform(k_adj, (N, N)) < 0.1).astype(jnp.float32)
    a = jnp.maximum(a, a.T) + jnp.eye(N, dtype=jnp.float32)
    deg = jnp.sum(a, axis=1)
    d_inv_sqrt = 1.0 / jnp.sqrt(deg)
    adj = a * d_inv_sqrt[:, None] * d_inv_sqrt[None, :]

    params = init_params(k_params, nfeat, nhid, nout, nclass)

    # tm=32 -> grid of 4 row tiles, exercises the pipelined / parallel grid path.
    out = gcn_synthetic_forward(x, adj, params, tm=32)
    out = jax.block_until_ready(out)

    # Reference uses the same bf16-rounded adjacency the kernel consumes.
    adj_q = adj.astype(jnp.bfloat16).astype(jnp.float32)
    ref = _reference(x, adj_q, params)

    assert out.shape == (N, nclass)
    assert bool(jnp.isfinite(out).all())
    # Tolerance covers the (mathematically exact) gc1 reassociation plus MXU
    # default-precision f32 matmul differences between Mosaic and XLA.
    assert jnp.allclose(out, ref, atol=1e-2, rtol=1e-2), "mismatch vs reference"

    print("KERNEL_OK")
</pallas_src>

<mosaic_0001>
module attributes {stable_mosaic.version = 11 : i64} {
  func.func @_gc1_kernel(%arg0: i32, %arg1: memref<32x128xbf16, #tpu.memory_space<vmem>>, %arg2: memref<128x16xf32, #tpu.memory_space<vmem>>, %arg3: memref<16x32xf32, #tpu.memory_space<vmem>>, %arg4: memref<1x32xf32, #tpu.memory_space<vmem>>, %arg5: memref<32x32xf32, #tpu.memory_space<vmem>>, %arg6: memref<32x32xf32, #tpu.memory_space<vmem>>, %arg7: memref<32x32xf32, #tpu.memory_space<vmem>>) attributes {dimension_semantics = [#tpu.dimension_semantics<parallel>], iteration_bounds = array<i64: 4>, scalar_prefetch = 0 : i64, scratch_operands = 0 : i64, tpu.core_type = #tpu.core_type<tc>, window_params = [{transform_indices = @transform_0, window_bounds = array<i64: 32, 128>}, {pipeline_mode = #tpu.pipeline_mode<synchronous>, transform_indices = @transform_1, window_bounds = array<i64: 128, 16>}, {pipeline_mode = #tpu.pipeline_mode<synchronous>, transform_indices = @transform_2, window_bounds = array<i64: 16, 32>}, {pipeline_mode = #tpu.pipeline_mode<synchronous>, transform_indices = @transform_3, window_bounds = array<i64: 1, 32>}, {pipeline_mode = #tpu.pipeline_mode<synchronous>, transform_indices = @transform_4, window_bounds = array<i64: 32, 32>}, {transform_indices = @transform_5, window_bounds = array<i64: 32, 32>}, {transform_indices = @transform_6, window_bounds = array<i64: 32, 32>}]} {
    %c0 = arith.constant 0 : index
    %c0_0 = arith.constant 0 : index
    %0 = vector.load %arg1[%c0, %c0_0] : memref<32x128xbf16, #tpu.memory_space<vmem>>, vector<32x128xbf16>
    %1 = arith.extf %0 : vector<32x128xbf16> to vector<32x128xf32>
    %c0_1 = arith.constant 0 : index
    %c0_2 = arith.constant 0 : index
    %2 = vector.load %arg2[%c0_1, %c0_2] : memref<128x16xf32, #tpu.memory_space<vmem>>, vector<128x16xf32>
    %cst = arith.constant dense<0.000000e+00> : vector<32x16xf32>
    %3 = tpu.matmul %1, %2, %cst {dimension_numbers = #tpu.dot_dimension_numbers<[1], [0], [0], [1], [0, 0, 1, 1], [], []>} : vector<32x128xf32>, vector<128x16xf32>, vector<32x16xf32> -> vector<32x16xf32>
    %c0_3 = arith.constant 0 : index
    %c0_4 = arith.constant 0 : index
    %4 = vector.load %arg3[%c0_3, %c0_4] : memref<16x32xf32, #tpu.memory_space<vmem>>, vector<16x32xf32>
    %cst_5 = arith.constant dense<0.000000e+00> : vector<32x32xf32>
    %5 = tpu.matmul %3, %4, %cst_5 {dimension_numbers = #tpu.dot_dimension_numbers<[1], [0], [0], [1], [0, 0, 1, 1], [], []>} : vector<32x16xf32>, vector<16x32xf32>, vector<32x32xf32> -> vector<32x32xf32>
    %c0_6 = arith.constant 0 : index
    %c0_7 = arith.constant 0 : index
    %6 = vector.load %arg4[%c0_6, %c0_7] : memref<1x32xf32, #tpu.memory_space<vmem>>, vector<1x32xf32>
    %7 = vector.broadcast %6 : vector<1x32xf32> to vector<32x32xf32>
    %8 = arith.addf %5, %7 : vector<32x32xf32>
    %cst_8 = arith.constant 0.000000e+00 : f32
    %9 = vector.broadcast %cst_8 : f32 to vector<32x32xf32>
    %10 = arith.maximumf %8, %9 : vector<32x32xf32>
    %c0_9 = arith.constant 0 : index
    %c0_10 = arith.constant 0 : index
    %11 = vector.load %arg6[%c0_9, %c0_10] : memref<32x32xf32, #tpu.memory_space<vmem>>, vector<32x32xf32>
    tpu.vector_store %arg6[%c0_9, %c0_10], %10 {strides = array<i32>} : memref<32x32xf32, #tpu.memory_space<vmem>>, vector<32x32xf32>,
    %c0_11 = arith.constant 0 : index
    %c0_12 = arith.constant 0 : index
    %12 = vector.load %arg5[%c0_11, %c0_12] : memref<32x32xf32, #tpu.memory_space<vmem>>, vector<32x32xf32>
    %cst_13 = arith.constant dense<0.000000e+00> : vector<32x32xf32>
    %13 = tpu.matmul %10, %12, %cst_13 {dimension_numbers = #tpu.dot_dimension_numbers<[1], [0], [0], [1], [0, 0, 1, 1], [], []>} : vector<32x32xf32>, vector<32x32xf32>, vector<32x32xf32> -> vector<32x32xf32>
    %c0_14 = arith.constant 0 : index
    %c0_15 = arith.constant 0 : index
    %14 = vector.load %arg7[%c0_14, %c0_15] : memref<32x32xf32, #tpu.memory_space<vmem>>, vector<32x32xf32>
    tpu.vector_store %arg7[%c0_14, %c0_15], %13 {strides = array<i32>} : memref<32x32xf32, #tpu.memory_space<vmem>>, vector<32x32xf32>,
    return
  }
  func.func @transform_0(%arg0: i32) -> (i32, i32) {
    %c0_i32 = arith.constant 0 : i32
    %c0_i32_0 = arith.constant 0 : i32
    return %arg0, %c0_i32 : i32, i32
  }
  func.func @transform_1(%arg0: i32) -> (i32, i32) {
    %c0_i32 = arith.constant 0 : i32
    %c0_i32_0 = arith.constant 0 : i32
    %c0_i32_1 = arith.constant 0 : i32
    return %c0_i32, %c0_i32_0 : i32, i32
  }
  func.func @transform_2(%arg0: i32) -> (i32, i32) {
    %c0_i32 = arith.constant 0 : i32
    %c0_i32_0 = arith.constant 0 : i32
    %c0_i32_1 = arith.constant 0 : i32
    return %c0_i32, %c0_i32_0 : i32, i32
  }
  func.func @transform_3(%arg0: i32) -> (i32, i32) {
    %c0_i32 = arith.constant 0 : i32
    %c0_i32_0 = arith.constant 0 : i32
    %c0_i32_1 = arith.constant 0 : i32
    return %c0_i32, %c0_i32_0 : i32, i32
  }
  func.func @transform_4(%arg0: i32) -> (i32, i32) {
    %c0_i32 = arith.constant 0 : i32
    %c0_i32_0 = arith.constant 0 : i32
    %c0_i32_1 = arith.constant 0 : i32
    return %c0_i32, %c0_i32_0 : i32, i32
  }
  func.func @transform_5(%arg0: i32) -> (i32, i32) {
    %c0_i32 = arith.constant 0 : i32
    %c0_i32_0 = arith.constant 0 : i32
    return %arg0, %c0_i32 : i32, i32
  }
  func.func @transform_6(%arg0: i32) -> (i32, i32) {
    %c0_i32 = arith.constant 0 : i32
    %c0_i32_0 = arith.constant 0 : i32
    return %arg0, %c0_i32 : i32, i32
  }
}

module attributes {stable_mosaic.version = 11 : i64} {
  func.func @_gc3_head_kernel(%arg0: i32, %arg1: memref<32x128xbf16, #tpu.memory_space<vmem>>, %arg2: memref<128x16xf32, #tpu.memory_space<vmem>>, %arg3: memref<1x16xf32, #tpu.memory_space<vmem>>, %arg4: memref<32x32xf32, #tpu.memory_space<vmem>>, %arg5: memref<32x32xf32, #tpu.memory_space<vmem>>, %arg6: memref<32x128xf32, #tpu.memory_space<vmem>>, %arg7: memref<32x128xf32, #tpu.memory_space<vmem>>, %arg8: memref<16x128xf32, #tpu.memory_space<vmem>>, %arg9: memref<1x128xf32, #tpu.memory_space<vmem>>, %arg10: memref<32x128xf32, #tpu.memory_space<vmem>>) attributes {dimension_semantics = [#tpu.dimension_semantics<parallel>], iteration_bounds = array<i64: 4>, scalar_prefetch = 0 : i64, scratch_operands = 0 : i64, tpu.core_type = #tpu.core_type<tc>, window_params = [{transform_indices = @transform_0, window_bounds = array<i64: 32, 128>}, {pipeline_mode = #tpu.pipeline_mode<synchronous>, transform_indices = @transform_1, window_bounds = array<i64: 128, 16>}, {pipeline_mode = #tpu.pipeline_mode<synchronous>, transform_indices = @transform_2, window_bounds = array<i64: 1, 16>}, {transform_indices = @transform_3, window_bounds = array<i64: 32, 32>}, {transform_indices = @transform_4, window_bounds = array<i64: 32, 32>}, {pipeline_mode = #tpu.pipeline_mode<synchronous>, transform_indices = @transform_5, window_bounds = array<i64: 32, 128>}, {pipeline_mode = #tpu.pipeline_mode<synchronous>, transform_indices = @transform_6, window_bounds = array<i64: 32, 128>}, {pipeline_mode = #tpu.pipeline_mode<synchronous>, transform_indices = @transform_7, window_bounds = array<i64: 16, 128>}, {pipeline_mode = #tpu.pipeline_mode<synchronous>, transform_indices = @transform_8, window_bounds = array<i64: 1, 128>}, {transform_indices = @transform_9, window_bounds = array<i64: 32, 128>}]} {
    %c0 = arith.constant 0 : index
    %c0_0 = arith.constant 0 : index
    %0 = vector.load %arg1[%c0, %c0_0] : memref<32x128xbf16, #tpu.memory_space<vmem>>, vector<32x128xbf16>
    %1 = arith.extf %0 : vector<32x128xbf16> to vector<32x128xf32>
    %c0_1 = arith.constant 0 : index
    %c0_2 = arith.constant 0 : index
    %2 = vector.load %arg2[%c0_1, %c0_2] : memref<128x16xf32, #tpu.memory_space<vmem>>, vector<128x16xf32>
    %cst = arith.constant dense<0.000000e+00> : vector<32x16xf32>
    %3 = tpu.matmul %1, %2, %cst {dimension_numbers = #tpu.dot_dimension_numbers<[1], [0], [0], [1], [0, 0, 1, 1], [], []>} : vector<32x128xf32>, vector<128x16xf32>, vector<32x16xf32> -> vector<32x16xf32>
    %c0_3 = arith.constant 0 : index
    %c0_4 = arith.constant 0 : index
    %4 = vector.load %arg3[%c0_3, %c0_4] : memref<1x16xf32, #tpu.memory_space<vmem>>, vector<1x16xf32>
    %5 = vector.broadcast %4 : vector<1x16xf32> to vector<32x16xf32>
    %6 = arith.addf %3, %5 : vector<32x16xf32>
    %c0_5 = arith.constant 0 : index
    %c0_6 = arith.constant 0 : index
    %7 = vector.load %arg4[%c0_5, %c0_6] : memref<32x32xf32, #tpu.memory_space<vmem>>, vector<32x32xf32>
    %c0_7 = arith.constant 0 : index
    %c0_8 = arith.constant 0 : index
    %8 = vector.load %arg6[%c0_7, %c0_8] : memref<32x128xf32, #tpu.memory_space<vmem>>, vector<32x128xf32>
    %cst_9 = arith.constant dense<0.000000e+00> : vector<32x128xf32>
    %9 = tpu.matmul %7, %8, %cst_9 {dimension_numbers = #tpu.dot_dimension_numbers<[1], [0], [0], [1], [0, 0, 1, 1], [], []>} : vector<32x32xf32>, vector<32x128xf32>, vector<32x128xf32> -> vector<32x128xf32>
    %c0_10 = arith.constant 0 : index
    %c0_11 = arith.constant 0 : index
    %10 = vector.load %arg5[%c0_10, %c0_11] : memref<32x32xf32, #tpu.memory_space<vmem>>, vector<32x32xf32>
    %c0_12 = arith.constant 0 : index
    %c0_13 = arith.constant 0 : index
    %11 = vector.load %arg7[%c0_12, %c0_13] : memref<32x128xf32, #tpu.memory_space<vmem>>, vector<32x128xf32>
    %cst_14 = arith.constant dense<0.000000e+00> : vector<32x128xf32>
    %12 = tpu.matmul %10, %11, %cst_14 {dimension_numbers = #tpu.dot_dimension_numbers<[1], [0], [0], [1], [0, 0, 1, 1], [], []>} : vector<32x32xf32>, vector<32x128xf32>, vector<32x128xf32> -> vector<32x128xf32>
    %13 = arith.addf %9, %12 : vector<32x128xf32>
    %c0_15 = arith.constant 0 : index
    %c0_16 = arith.constant 0 : index
    %14 = vector.load %arg8[%c0_15, %c0_16] : memref<16x128xf32, #tpu.memory_space<vmem>>, vector<16x128xf32>
    %cst_17 = arith.constant dense<0.000000e+00> : vector<32x128xf32>
    %15 = tpu.matmul %6, %14, %cst_17 {dimension_numbers = #tpu.dot_dimension_numbers<[1], [0], [0], [1], [0, 0, 1, 1], [], []>} : vector<32x16xf32>, vector<16x128xf32>, vector<32x128xf32> -> vector<32x128xf32>
    %16 = arith.addf %13, %15 : vector<32x128xf32>
    %c0_18 = arith.constant 0 : index
    %c0_19 = arith.constant 0 : index
    %17 = vector.load %arg9[%c0_18, %c0_19] : memref<1x128xf32, #tpu.memory_space<vmem>>, vector<1x128xf32>
    %18 = vector.broadcast %17 : vector<1x128xf32> to vector<32x128xf32>
    %19 = arith.addf %16, %18 : vector<32x128xf32>
    %20 = tpu.iota {dimensions = array<i32: 1>} : vector<32x128xi32>
    %c4_i32 = arith.constant 4 : i32
    %21 = vector.broadcast %c4_i32 : i32 to vector<32x128xi32>
    %22 = arith.cmpi slt, %20, %21 : vector<32x128xi32>
    %cst_20 = arith.constant 0xFF800000 : f32
    %23 = vector.broadcast %cst_20 : f32 to vector<32x128xf32>
    %24 = arith.select %22, %19, %23 : vector<32x128xi1>, vector<32x128xf32>
    %cst_21 = arith.constant dense<0xFF800000> : vector<32xf32>
    %25 = vector.multi_reduction <maximumf>, %24, %cst_21 [1] : vector<32x128xf32> to vector<32xf32>
    %26 = vector.shape_cast %25 : vector<32xf32> to vector<32x1xf32>
    %27 = vector.broadcast %26 : vector<32x1xf32> to vector<32x128xf32>
    %28 = arith.subf %24, %27 : vector<32x128xf32>
    %29 = math.exp %28 : vector<32x128xf32>
    %cst_22 = arith.constant dense<0.000000e+00> : vector<32xf32>
    %30 = vector.multi_reduction <add>, %29, %cst_22 [1] : vector<32x128xf32> to vector<32xf32>
    %31 = vector.shape_cast %30 : vector<32xf32> to vector<32x1xf32>
    %32 = math.log %31 : vector<32x1xf32>
    %33 = vector.broadcast %26 : vector<32x1xf32> to vector<32x128xf32>
    %34 = arith.subf %19, %33 : vector<32x128xf32>
    %35 = vector.broadcast %32 : vector<32x1xf32> to vector<32x128xf32>
    %36 = arith.subf %34, %35 : vector<32x128xf32>
    %c0_23 = arith.constant 0 : index
    %c0_24 = arith.constant 0 : index
    %37 = vector.load %arg10[%c0_23, %c0_24] : memref<32x128xf32, #tpu.memory_space<vmem>>, vector<32x128xf32>
    tpu.vector_store %arg10[%c0_23, %c0_24], %36 {strides = array<i32>} : memref<32x128xf32, #tpu.memory_space<vmem>>, vector<32x128xf32>,
    return
  }
  func.func @transform_0(%arg0: i32) -> (i32, i32) {
    %c0_i32 = arith.constant 0 : i32
    %c0_i32_0 = arith.constant 0 : i32
    return %arg0, %c0_i32 : i32, i32
  }
  func.func @transform_1(%arg0: i32) -> (i32, i32) {
    %c0_i32 = arith.constant 0 : i32
    %c0_i32_0 = arith.constant 0 : i32
    %c0_i32_1 = arith.constant 0 : i32
    return %c0_i32, %c0_i32_0 : i32, i32
  }
  func.func @transform_2(%arg0: i32) -> (i32, i32) {
    %c0_i32 = arith.constant 0 : i32
    %c0_i32_0 = arith.constant 0 : i32
    %c0_i32_1 = arith.constant 0 : i32
    return %c0_i32, %c0_i32_0 : i32, i32
  }
  func.func @transform_3(%arg0: i32) -> (i32, i32) {
    %c0_i32 = arith.constant 0 : i32
    %c0_i32_0 = arith.constant 0 : i32
    return %arg0, %c0_i32 : i32, i32
  }
  func.func @transform_4(%arg0: i32) -> (i32, i32) {
    %c0_i32 = arith.constant 0 : i32
    %c0_i32_0 = arith.constant 0 : i32
    return %arg0, %c0_i32 : i32, i32
  }
  func.func @transform_5(%arg0: i32) -> (i32, i32) {
    %c0_i32 = arith.constant 0 : i32
    %c0_i32_0 = arith.constant 0 : i32
    %c0_i32_1 = arith.constant 0 : i32
    return %c0_i32, %c0_i32_0 : i32, i32
  }
  func.func @transform_6(%arg0: i32) -> (i32, i32) {
    %c0_i32 = arith.constant 0 : i32
    %c0_i32_0 = arith.constant 0 : i32
    %c0_i32_1 = arith.constant 0 : i32
    return %c0_i32, %c0_i32_0 : i32, i32
  }
  func.func @transform_7(%arg0: i32) -> (i32, i32) {
    %c0_i32 = arith.constant 0 : i32
    %c0_i32_0 = arith.constant 0 : i32
    %c0_i32_1 = arith.constant 0 : i32
    return %c0_i32, %c0_i32_0 : i32, i32
  }
  func.func @transform_8(%arg0: i32) -> (i32, i32) {
    %c0_i32 = arith.constant 0 : i32
    %c0_i32_0 = arith.constant 0 : i32
    %c0_i32_1 = arith.constant 0 : i32
    return %c0_i32, %c0_i32_0 : i32, i32
  }
  func.func @transform_9(%arg0: i32) -> (i32, i32) {
    %c0_i32 = arith.constant 0 : i32
    %c0_i32_0 = arith.constant 0 : i32
    return %arg0, %c0_i32 : i32, i32
  }
}

module attributes {stable_mosaic.version = 11 : i64} {
  func.func @_gc2_kernel(%arg0: i32, %arg1: memref<32x128xbf16, #tpu.memory_space<vmem>>, %arg2: memref<128x32xf32, #tpu.memory_space<vmem>>, %arg3: memref<1x32xf32, #tpu.memory_space<vmem>>, %arg4: memref<32x16xf32, #tpu.memory_space<vmem>>, %arg5: memref<32x32xf32, #tpu.memory_space<vmem>>, %arg6: memref<32x16xf32, #tpu.memory_space<vmem>>) attributes {dimension_semantics = [#tpu.dimension_semantics<parallel>], iteration_bounds = array<i64: 4>, scalar_prefetch = 0 : i64, scratch_operands = 0 : i64, tpu.core_type = #tpu.core_type<tc>, window_params = [{transform_indices = @transform_0, window_bounds = array<i64: 32, 128>}, {pipeline_mode = #tpu.pipeline_mode<synchronous>, transform_indices = @transform_1, window_bounds = array<i64: 128, 32>}, {pipeline_mode = #tpu.pipeline_mode<synchronous>, transform_indices = @transform_2, window_bounds = array<i64: 1, 32>}, {pipeline_mode = #tpu.pipeline_mode<synchronous>, transform_indices = @transform_3, window_bounds = array<i64: 32, 16>}, {transform_indices = @transform_4, window_bounds = array<i64: 32, 32>}, {transform_indices = @transform_5, window_bounds = array<i64: 32, 16>}]} {
    %c0 = arith.constant 0 : index
    %c0_0 = arith.constant 0 : index
    %0 = vector.load %arg1[%c0, %c0_0] : memref<32x128xbf16, #tpu.memory_space<vmem>>, vector<32x128xbf16>
    %1 = arith.extf %0 : vector<32x128xbf16> to vector<32x128xf32>
    %c0_1 = arith.constant 0 : index
    %c0_2 = arith.constant 0 : index
    %2 = vector.load %arg2[%c0_1, %c0_2] : memref<128x32xf32, #tpu.memory_space<vmem>>, vector<128x32xf32>
    %cst = arith.constant dense<0.000000e+00> : vector<32x32xf32>
    %3 = tpu.matmul %1, %2, %cst {dimension_numbers = #tpu.dot_dimension_numbers<[1], [0], [0], [1], [0, 0, 1, 1], [], []>} : vector<32x128xf32>, vector<128x32xf32>, vector<32x32xf32> -> vector<32x32xf32>
    %c0_3 = arith.constant 0 : index
    %c0_4 = arith.constant 0 : index
    %4 = vector.load %arg3[%c0_3, %c0_4] : memref<1x32xf32, #tpu.memory_space<vmem>>, vector<1x32xf32>
    %5 = vector.broadcast %4 : vector<1x32xf32> to vector<32x32xf32>
    %6 = arith.addf %3, %5 : vector<32x32xf32>
    %cst_5 = arith.constant 0.000000e+00 : f32
    %7 = vector.broadcast %cst_5 : f32 to vector<32x32xf32>
    %8 = arith.maximumf %6, %7 : vector<32x32xf32>
    %c0_6 = arith.constant 0 : index
    %c0_7 = arith.constant 0 : index
    %9 = vector.load %arg5[%c0_6, %c0_7] : memref<32x32xf32, #tpu.memory_space<vmem>>, vector<32x32xf32>
    tpu.vector_store %arg5[%c0_6, %c0_7], %8 {strides = array<i32>} : memref<32x32xf32, #tpu.memory_space<vmem>>, vector<32x32xf32>,
    %c0_8 = arith.constant 0 : index
    %c0_9 = arith.constant 0 : index
    %10 = vector.load %arg4[%c0_8, %c0_9] : memref<32x16xf32, #tpu.memory_space<vmem>>, vector<32x16xf32>
    %cst_10 = arith.constant dense<0.000000e+00> : vector<32x16xf32>
    %11 = tpu.matmul %8, %10, %cst_10 {dimension_numbers = #tpu.dot_dimension_numbers<[1], [0], [0], [1], [0, 0, 1, 1], [], []>} : vector<32x32xf32>, vector<32x16xf32>, vector<32x16xf32> -> vector<32x16xf32>
    %c0_11 = arith.constant 0 : index
    %c0_12 = arith.constant 0 : index
    %12 = vector.load %arg6[%c0_11, %c0_12] : memref<32x16xf32, #tpu.memory_space<vmem>>, vector<32x16xf32>
    tpu.vector_store %arg6[%c0_11, %c0_12], %11 {strides = array<i32>} : memref<32x16xf32, #tpu.memory_space<vmem>>, vector<32x16xf32>,
    return
  }
  func.func @transform_0(%arg0: i32) -> (i32, i32) {
    %c0_i32 = arith.constant 0 : i32
    %c0_i32_0 = arith.constant 0 : i32
    return %arg0, %c0_i32 : i32, i32
  }
  func.func @transform_1(%arg0: i32) -> (i32, i32) {
    %c0_i32 = arith.constant 0 : i32
    %c0_i32_0 = arith.constant 0 : i32
    %c0_i32_1 = arith.constant 0 : i32
    return %c0_i32, %c0_i32_0 : i32, i32
  }
  func.func @transform_2(%arg0: i32) -> (i32, i32) {
    %c0_i32 = arith.constant 0 : i32
    %c0_i32_0 = arith.constant 0 : i32
    %c0_i32_1 = arith.constant 0 : i32
    return %c0_i32, %c0_i32_0 : i32, i32
  }
  func.func @transform_3(%arg0: i32) -> (i32, i32) {
    %c0_i32 = arith.constant 0 : i32
    %c0_i32_0 = arith.constant 0 : i32
    %c0_i32_1 = arith.constant 0 : i32
    return %c0_i32, %c0_i32_0 : i32, i32
  }
  func.func @transform_4(%arg0: i32) -> (i32, i32) {
    %c0_i32 = arith.constant 0 : i32
    %c0_i32_0 = arith.constant 0 : i32
    return %arg0, %c0_i32 : i32, i32
  }
  func.func @transform_5(%arg0: i32) -> (i32, i32) {
    %c0_i32 = arith.constant 0 : i32
    %c0_i32_0 = arith.constant 0 : i32
    return %arg0, %c0_i32 : i32, i32
  }
}

</mosaic_0001>

<llo_original>
// kernel: gcn_synthetic_forward.5
$region0: #{gcn_synthetic_forward.5}
  #allocation0 [shape = 'u32[]', space=smem, size = 0x4, offset = 0x4, fixed_abs, tag = 'smem constant byte address 0x4 - core index']
  #allocation1 [shape = 'u32[144,128]{1,0:T(1,128)}', space=vmem, size = 0x12000, scoped, tag = 'internal scratch']
  %s0 = inlined_call_operand.vmem [shape: bf16[128,128], index: 0, kind: input, shape index: {}]
  %s1 = inlined_call_operand.vmem [shape: f32[128,16], index: 1, kind: input, shape index: {}]
  %s2 = inlined_call_operand.vmem [shape: f32[1,16], index: 2, kind: input, shape index: {}]
  %s3 = inlined_call_operand.vmem [shape: f32[128,32], index: 3, kind: input, shape index: {}]
  %s4 = inlined_call_operand.vmem [shape: f32[128,32], index: 4, kind: input, shape index: {}]
  %s5 = inlined_call_operand.vmem [shape: f32[32,128], index: 5, kind: input, shape index: {}]
  %s6 = inlined_call_operand.vmem [shape: f32[32,128], index: 6, kind: input, shape index: {}]
  %s7 = inlined_call_operand.vmem [shape: f32[16,128], index: 7, kind: input, shape index: {}]
  %s8 = inlined_call_operand.vmem [shape: f32[1,128], index: 8, kind: input, shape index: {}]
  %s9 = inlined_call_operand.vmem [shape: f32[128,128], index: 9, kind: output, shape index: {}]
  %s10 = sld [smem:[#allocation0]]
  $region69: #{gcn_synthetic_forward.5} parent=0
    _
  %s12 = ssub.s32 1, %s10
  %s13 = scalar_select 0, %s12, %s10
  loop: start=0, step=1, limit=6
  $region2: #{gcn_synthetic_forward.5} parent=0 // loop_pre_header
    _
  $region3: #{gcn_synthetic_forward.5} parent=0 // loop_header
    %s15 = sphi 0, %s19
    %p16 = scmp.ge.s32.totalorder %s15, 6
    %s25 = sphi 0, %s27
    %s28 = sphi 0, %s25
    %s29 = sphi 0, %s28
    %s45 = sphi 0, %s29
    %s49 = sphi 0, %s49
    %s51 = sphi 0, %s49
    %s52 = sphi 0, %s51
    %s66 = sphi 0, %s52
    %s70 = sphi 0, %s70
    %s72 = sphi 0, %s70
    %s73 = sphi 0, %s72
    %s87 = sphi 0, %s73
    %s93 = sphi 0, %s95
    %s96 = sphi 0, %s93
    %s97 = sphi 0, %s96
    %s113 = sphi 0, %s97
    %s119 = sphi 0, %s121
    %s122 = sphi 0, %s119
    %s123 = sphi 0, %s122
    %s139 = sphi 0, %s123
    %s143 = sphi 0, %s143
    %s145 = sphi 0, %s143
    %s146 = sphi 0, %s145
    %s160 = sphi 0, %s146
    %s164 = sphi 0, %s164
    %s166 = sphi 0, %s164
    %s167 = sphi 0, %s166
    %s181 = sphi 0, %s167
    %s185 = sphi 0, %s185
    %s187 = sphi 0, %s185
    %s188 = sphi 0, %s187
    %s202 = sphi 0, %s188
    %s206 = sphi 0, %s206
    %s208 = sphi 0, %s206
    %s209 = sphi 0, %s208
    %s223 = sphi 0, %s209
    %s229 = sphi 0, %s231
    %s232 = sphi 0, %s229
    %s233 = sphi 0, %s232
    %s249 = sphi 0, %s233
  $region4: #{gcn_synthetic_forward.5} parent=0 // loop_header_branch
    %18 = sbr.rel (%p16) target = $region8
  $region5: #{gcn_synthetic_forward.5} parent=0 // loop_body
    %s20 = ssub.s32 %s15, 1
    %s21 = ssub.s32 %s15, 2
    %s22 = sadd.s32 %s15, 1
    %s23 = ssub.s32 %s15, %s22
    %p24 = scmp.eq.s32.totalorder %s23, 0
    %s26 = sadd.s32 %s25, 1
    %s27 = scalar_select %p24, %s25, %s26
    %p30 = pneg %p24
    %p31 = scmp.eq.s32.totalorder %s15, 3
    %p32 = por %p30, %p31
    %p33 = scmp.ne.s32.totalorder %s25, %s28
    %p34 = scmp.eq.s32.totalorder %s15, 0
    %p35 = por %p33, %p34
    %p36 = scmp.ne.s32.totalorder %s25, %s28
    %p37 = scmp.eq.s32.totalorder %s20, 3
    %p38 = por %p36, %p37
    %p39 = scmp.ne.s32.totalorder %s28, %s29
    %p40 = scmp.eq.s32.totalorder %s20, 0
    %p41 = por %p39, %p40
    %p42 = scmp.ne.s32.totalorder %s28, %s29
    %p43 = scmp.eq.s32.totalorder %s21, 3
    %p44 = por %p42, %p43
    %p46 = scmp.ne.s32.totalorder %s29, %s45
    %p47 = scmp.eq.s32.totalorder %s21, 0
    %p48 = por %p46, %p47
    %s50 = sadd.s32 %s49, 1
    %p53 = scmp.eq.s32.totalorder %s15, 3
    %p54 = scmp.ne.s32.totalorder %s49, %s51
    %p55 = scmp.eq.s32.totalorder %s15, 0
    %p56 = por %p54, %p55
    %p57 = scmp.ne.s32.totalorder %s49, %s51
    %p58 = scmp.eq.s32.totalorder %s20, 3
    %p59 = por %p57, %p58
    %p60 = scmp.ne.s32.totalorder %s51, %s52
    %p61 = scmp.eq.s32.totalorder %s20, 0
    %p62 = por %p60, %p61
    %p63 = scmp.ne.s32.totalorder %s51, %s52
    %p64 = scmp.eq.s32.totalorder %s21, 3
    %p65 = por %p63, %p64
    %p67 = scmp.ne.s32.totalorder %s52, %s66
    %p68 = scmp.eq.s32.totalorder %s21, 0
    %p69 = por %p67, %p68
    %s71 = sadd.s32 %s70, 1
    %p74 = scmp.eq.s32.totalorder %s15, 3
    %p75 = scmp.ne.s32.totalorder %s70, %s72
    %p76 = scmp.eq.s32.totalorder %s15, 0
    %p77 = por %p75, %p76
    %p78 = scmp.ne.s32.totalorder %s70, %s72
    %p79 = scmp.eq.s32.totalorder %s20, 3
    %p80 = por %p78, %p79
    %p81 = scmp.ne.s32.totalorder %s72, %s73
    %p82 = scmp.eq.s32.totalorder %s20, 0
    %p83 = por %p81, %p82
    %p84 = scmp.ne.s32.totalorder %s72, %s73
    %p85 = scmp.eq.s32.totalorder %s21, 3
    %p86 = por %p84, %p85
    %p88 = scmp.ne.s32.totalorder %s73, %s87
    %p89 = scmp.eq.s32.totalorder %s21, 0
    %p90 = por %p88, %p89
    %s91 = ssub.s32 %s15, %s22
    %p92 = scmp.eq.s32.totalorder %s91, 0
    %s94 = sadd.s32 %s93, 1
    %s95 = scalar_select %p92, %s93, %s94
    %p98 = pneg %p92
    %p99 = scmp.eq.s32.totalorder %s15, 3
    %p100 = por %p98, %p99
    %p101 = scmp.ne.s32.totalorder %s93, %s96
    %p102 = scmp.eq.s32.totalorder %s15, 0
    %p103 = por %p101, %p102
    %p104 = scmp.ne.s32.totalorder %s93, %s96
    %p105 = scmp.eq.s32.totalorder %s20, 3
    %p106 = por %p104, %p105
    %p107 = scmp.ne.s32.totalorder %s96, %s97
    %p108 = scmp.eq.s32.totalorder %s20, 0
    %p109 = por %p107, %p108
    %p110 = scmp.ne.s32.totalorder %s96, %s97
    %p111 = scmp.eq.s32.totalorder %s21, 3
    %p112 = por %p110, %p111
    %p114 = scmp.ne.s32.totalorder %s97, %s113
    %p115 = scmp.eq.s32.totalorder %s21, 0
    %p116 = por %p114, %p115
    %s117 = ssub.s32 %s15, %s22
    %p118 = scmp.eq.s32.totalorder %s117, 0
    %s120 = sadd.s32 %s119, 1
    %s121 = scalar_select %p118, %s119, %s120
    %p124 = pneg %p118
    %p125 = scmp.eq.s32.totalorder %s15, 3
    %p126 = por %p124, %p125
    %p127 = scmp.ne.s32.totalorder %s119, %s122
    %p128 = scmp.eq.s32.totalorder %s15, 0
    %p129 = por %p127, %p128
    %p130 = scmp.ne.s32.totalorder %s119, %s122
    %p131 = scmp.eq.s32.totalorder %s20, 3
    %p132 = por %p130, %p131
    %p133 = scmp.ne.s32.totalorder %s122, %s123
    %p134 = scmp.eq.s32.totalorder %s20, 0
    %p135 = por %p133, %p134
    %p136 = scmp.ne.s32.totalorder %s122, %s123
    %p137 = scmp.eq.s32.totalorder %s21, 3
    %p138 = por %p136, %p137
    %p140 = scmp.ne.s32.totalorder %s123, %s139
    %p141 = scmp.eq.s32.totalorder %s21, 0
    %p142 = por %p140, %p141
    %s144 = sadd.s32 %s143, 1
    %p147 = scmp.eq.s32.totalorder %s15, 3
    %p148 = scmp.ne.s32.totalorder %s143, %s145
    %p149 = scmp.eq.s32.totalorder %s15, 0
    %p150 = por %p148, %p149
    %p151 = scmp.ne.s32.totalorder %s143, %s145
    %p152 = scmp.eq.s32.totalorder %s20, 3
    %p153 = por %p151, %p152
    %p154 = scmp.ne.s32.totalorder %s145, %s146
    %p155 = scmp.eq.s32.totalorder %s20, 0
    %p156 = por %p154, %p155
    %p157 = scmp.ne.s32.totalorder %s145, %s146
    %p158 = scmp.eq.s32.totalorder %s21, 3
    %p159 = por %p157, %p158
    %p161 = scmp.ne.s32.totalorder %s146, %s160
    %p162 = scmp.eq.s32.totalorder %s21, 0
    %p163 = por %p161, %p162
    %s165 = sadd.s32 %s164, 1
    %p168 = scmp.eq.s32.totalorder %s15, 3
    %p169 = scmp.ne.s32.totalorder %s164, %s166
    %p170 = scmp.eq.s32.totalorder %s15, 0
    %p171 = por %p169, %p170
    %p172 = scmp.ne.s32.totalorder %s164, %s166
    %p173 = scmp.eq.s32.totalorder %s20, 3
    %p174 = por %p172, %p173
    %p175 = scmp.ne.s32.totalorder %s166, %s167
    %p176 = scmp.eq.s32.totalorder %s20, 0
    %p177 = por %p175, %p176
    %p178 = scmp.ne.s32.totalorder %s166, %s167
    %p179 = scmp.eq.s32.totalorder %s21, 3
    %p180 = por %p178, %p179
    %p182 = scmp.ne.s32.totalorder %s167, %s181
    %p183 = scmp.eq.s32.totalorder %s21, 0
    %p184 = por %p182, %p183
    %s186 = sadd.s32 %s185, 1
    %p189 = scmp.eq.s32.totalorder %s15, 3
    %p190 = scmp.ne.s32.totalorder %s185, %s187
    %p191 = scmp.eq.s32.totalorder %s15, 0
    %p192 = por %p190, %p191
    %p193 = scmp.ne.s32.totalorder %s185, %s187
    %p194 = scmp.eq.s32.totalorder %s20, 3
    %p195 = por %p193, %p194
    %p196 = scmp.ne.s32.totalorder %s187, %s188
    %p197 = scmp.eq.s32.totalorder %s20, 0
    %p198 = por %p196, %p197
    %p199 = scmp.ne.s32.totalorder %s187, %s188
    %p200 = scmp.eq.s32.totalorder %s21, 3
    %p201 = por %p199, %p200
    %p203 = scmp.ne.s32.totalorder %s188, %s202
    %p204 = scmp.eq.s32.totalorder %s21, 0
    %p205 = por %p203, %p204
    %s207 = sadd.s32 %s206, 1
    %p210 = scmp.eq.s32.totalorder %s15, 3
    %p211 = scmp.ne.s32.totalorder %s206, %s208
    %p212 = scmp.eq.s32.totalorder %s15, 0
    %p213 = por %p211, %p212
    %p214 = scmp.ne.s32.totalorder %s206, %s208
    %p215 = scmp.eq.s32.totalorder %s20, 3
    %p216 = por %p214, %p215
    %p217 = scmp.ne.s32.totalorder %s208, %s209
    %p218 = scmp.eq.s32.totalorder %s20, 0
    %p219 = por %p217, %p218
    %p220 = scmp.ne.s32.totalorder %s208, %s209
    %p221 = scmp.eq.s32.totalorder %s21, 3
    %p222 = por %p220, %p221
    %p224 = scmp.ne.s32.totalorder %s209, %s223
    %p225 = scmp.eq.s32.totalorder %s21, 0
    %p226 = por %p224, %p225
    %s227 = ssub.s32 %s15, %s22
    %p228 = scmp.eq.s32.totalorder %s227, 0
    %s230 = sadd.s32 %s229, 1
    %s231 = scalar_select %p228, %s229, %s230
    %p234 = pneg %p228
    %p235 = scmp.eq.s32.totalorder %s15, 3
    %p236 = por %p234, %p235
    %p237 = scmp.ne.s32.totalorder %s229, %s232
    %p238 = scmp.eq.s32.totalorder %s15, 0
    %p239 = por %p237, %p238
    %p240 = scmp.ne.s32.totalorder %s229, %s232
    %p241 = scmp.eq.s32.totalorder %s20, 3
    %p242 = por %p240, %p241
    %p243 = scmp.ne.s32.totalorder %s232, %s233
    %p244 = scmp.eq.s32.totalorder %s20, 0
    %p245 = por %p243, %p244
    %p246 = scmp.ne.s32.totalorder %s232, %s233
    %p247 = scmp.eq.s32.totalorder %s21, 3
    %p248 = por %p246, %p247
    %p250 = scmp.ne.s32.totalorder %s233, %s249
    %p251 = scmp.eq.s32.totalorder %s21, 0
    %p252 = por %p250, %p251
    %p253 = scmp.le.s32.totalorder 1, %s15
    %p254 = scmp.lt.s32.totalorder %s15, 5
    %p255 = pnand %p253, %p254
    %p256 = pneg %p255
    // Predicated region
    $region9: #{gcn_synthetic_forward.5} parent=5 // pred_check
      _
    $region10: #{gcn_synthetic_forward.5} parent=5 // pred_check_branch
      %258 = sbr.rel (%p255) target = $region12
    $region11: #{gcn_synthetic_forward.5} parent=5 // pred_region
      %s259 = ssub.s32 %s15, 1
      // Predicated region
      $region13: #{gcn_synthetic_forward.5} parent=11 // pred_check
        %p260 = pneg %p62
      $region14: #{gcn_synthetic_forward.5} parent=11 // pred_check_branch
        %262 = sbr.rel (%p260) target = $region16
      $region15: #{gcn_synthetic_forward.5} parent=11 // pred_region
        _
      $region16: #{gcn_synthetic_forward.5} parent=11 // pred_fallthru
        _
      // Predicated region
      $region17: #{gcn_synthetic_forward.5} parent=11 // pred_check
        %p263 = pneg %p83
      $region18: #{gcn_synthetic_forward.5} parent=11 // pred_check_branch
        %265 = sbr.rel (%p263) target = $region20
      $region19: #{gcn_synthetic_forward.5} parent=11 // pred_region
        _
      $region20: #{gcn_synthetic_forward.5} parent=11 // pred_fallthru
        _
      // Predicated region
      $region21: #{gcn_synthetic_forward.5} parent=11 // pred_check
        %p266 = pneg %p156
      $region22: #{gcn_synthetic_forward.5} parent=11 // pred_check_branch
        %268 = sbr.rel (%p266) target = $region24
      $region23: #{gcn_synthetic_forward.5} parent=11 // pred_region
        _
      $region24: #{gcn_synthetic_forward.5} parent=11 // pred_fallthru
        _
      // Predicated region
      $region25: #{gcn_synthetic_forward.5} parent=11 // pred_check
        %p269 = pneg %p177
      $region26: #{gcn_synthetic_forward.5} parent=11 // pred_check_branch
        %271 = sbr.rel (%p269) target = $region28
      $region27: #{gcn_synthetic_forward.5} parent=11 // pred_region
        _
      $region28: #{gcn_synthetic_forward.5} parent=11 // pred_fallthru
        _
      // Predicated region
      $region29: #{gcn_synthetic_forward.5} parent=11 // pred_check
        %p272 = pneg %p198
      $region30: #{gcn_synthetic_forward.5} parent=11 // pred_check_branch
        %274 = sbr.rel (%p272) target = $region32
      $region31: #{gcn_synthetic_forward.5} parent=11 // pred_region
        _
      $region32: #{gcn_synthetic_forward.5} parent=11 // pred_fallthru
        _
      // Predicated region
      $region33: #{gcn_synthetic_forward.5} parent=11 // pred_check
        %p275 = pneg %p219
      $region34: #{gcn_synthetic_forward.5} parent=11 // pred_check_branch
        %277 = sbr.rel (%p275) target = $region36
      $region35: #{gcn_synthetic_forward.5} parent=11 // pred_region
        _
      $region36: #{gcn_synthetic_forward.5} parent=11 // pred_fallthru
        _
    $region12: #{gcn_synthetic_forward.5} parent=5 // pred_fallthru
      _
    %p278 = scmp.lt.s32.totalorder %s15, 4
    // Predicated region
    $region37: #{gcn_synthetic_forward.5} parent=5 // pred_check
      %p279 = pneg %p278
    $region38: #{gcn_synthetic_forward.5} parent=5 // pred_check_branch
      %281 = sbr.rel (%p279) target = $region40
    $region39: #{gcn_synthetic_forward.5} parent=5 // pred_region
      // Predicated region
      $region41: #{gcn_synthetic_forward.5} parent=39 // pred_check
        %p282 = pneg %p35
      $region42: #{gcn_synthetic_forward.5} parent=39 // pred_check_branch
        %284 = sbr.rel (%p282) target = $region44
      $region43: #{gcn_synthetic_forward.5} parent=39 // pred_region
        %s285 = smul.u32 4, %s15
        %p286 = scmp.lt.s32.totalorder %s285, 15
        %s287 = scalar_select %p286, %s285, 15
        %s288 = smul.addr %s287, 4
        %s289 = scalar_lea.vmem %s0, %s288
        %s290 = smul.u32 4, %s15
      $region44: #{gcn_synthetic_forward.5} parent=39 // pred_fallthru
        _
      // Predicated region
      $region45: #{gcn_synthetic_forward.5} parent=39 // pred_check
        %p291 = pneg %p103
      $region46: #{gcn_synthetic_forward.5} parent=39 // pred_check_branch
        %293 = sbr.rel (%p291) target = $region48
      $region47: #{gcn_synthetic_forward.5} parent=39 // pred_region
        %s294 = smul.u32 4, %s15
        %p295 = scmp.lt.s32.totalorder %s294, 15
        %s296 = scalar_select %p295, %s294, 15
        %s297 = smul.addr %s296, 8
        %s298 = scalar_lea.vmem %s3, %s297
        %s299 = smul.u32 4, %s15
      $region48: #{gcn_synthetic_forward.5} parent=39 // pred_fallthru
        _
      // Predicated region
      $region49: #{gcn_synthetic_forward.5} parent=39 // pred_check
        %p300 = pneg %p129
      $region50: #{gcn_synthetic_forward.5} parent=39 // pred_check_branch
        %302 = sbr.rel (%p300) target = $region52
      $region51: #{gcn_synthetic_forward.5} parent=39 // pred_region
        %s303 = smul.u32 4, %s15
        %p304 = scmp.lt.s32.totalorder %s303, 15
        %s305 = scalar_select %p304, %s303, 15
        %s306 = smul.addr %s305, 8
        %s307 = scalar_lea.vmem %s4, %s306
        %s308 = smul.u32 4, %s15
      $region52: #{gcn_synthetic_forward.5} parent=39 // pred_fallthru
        _
    $region40: #{gcn_synthetic_forward.5} parent=5 // pred_fallthru
      _
    %p309 = scmp.le.s32.totalorder 1, %s15
    %p310 = scmp.lt.s32.totalorder %s15, 5
    %p311 = pnand %p309, %p310
    %p312 = pneg %p311
    // Predicated region
    $region53: #{gcn_synthetic_forward.5} parent=5 // pred_check
      _
    $region54: #{gcn_synthetic_forward.5} parent=5 // pred_check_branch
      %314 = sbr.rel (%p311) target = $region56
    $region55: #{gcn_synthetic_forward.5} parent=5 // pred_region
      %s315 = ssub.s32 %s15, 1
      %s316 = smul.u32 4, %s20
      %p317 = scmp.lt.s32.totalorder %s316, 15
      %s318 = scalar_select %p317, %s316, 15
      %s319 = smul.addr %s318, 4
      %s320 = scalar_lea.vmem %s0, %s319
      %p321 = pneg %p41
      %p322 = pneg %p38
      %p323 = pneg %p62
      %p324 = pneg %p59
      %p325 = pneg %p83
      %p326 = pneg %p80
      %s327 = smul.u32 4, %s20
      %p328 = scmp.lt.s32.totalorder %s327, 15
      %s329 = scalar_select %p328, %s327, 15
      %s330 = smul.addr %s329, 8
      %s331 = scalar_lea.vmem %s3, %s330
      %p332 = pneg %p109
      %p333 = pneg %p106
      %s334 = smul.u32 4, %s20
      %p335 = scmp.lt.s32.totalorder %s334, 15
      %s336 = scalar_select %p335, %s334, 15
      %s337 = smul.addr %s336, 8
      %s338 = scalar_lea.vmem %s4, %s337
      %p339 = pneg %p135
      %p340 = pneg %p132
      %p341 = pneg %p156
      %p342 = pneg %p153
      %p343 = pneg %p177
      %p344 = pneg %p174
      %p345 = pneg %p198
      %p346 = pneg %p195
      %p347 = pneg %p219
      %p348 = pneg %p216
      %p349 = pneg %p245
      %p350 = pneg %p242
      %s351 = smul.u32 4, %s20
      %p352 = scmp.lt.s32.totalorder %s351, 15
      %s353 = scalar_select %p352, %s351, 15
      %s354 = smul.addr %s353, 8
      %s355 = scalar_lea.vmem %s9, %s354
      %s356 = smul.u32 4, %s20
      %p357 = scmp.lt.s32.totalorder %s356, 15
      %s358 = scalar_select %p357, %s356, 15
      %s359 = smul.addr %s358, 4
      %s360 = scalar_lea.vmem %s0, %s359
      %s361 = smul.u32 4, %s20
      %s362 = smul.u32 4, %s20
      %p363 = scmp.lt.s32.totalorder %s362, 15
      %s364 = scalar_select %p363, %s362, 15
      %s365 = smul.addr %s364, 8
      %s366 = scalar_lea.vmem %s3, %s365
      %s367 = smul.u32 4, %s20
      %s368 = smul.u32 4, %s20
      %p369 = scmp.lt.s32.totalorder %s368, 15
      %s370 = scalar_select %p369, %s368, 15
      %s371 = smul.addr %s370, 8
      %s372 = scalar_lea.vmem %s4, %s371
      %s373 = smul.u32 4, %s20
      %s374 = smul.u32 4, %s20
      %p375 = scmp.lt.s32.totalorder %s374, 15
      %s376 = scalar_select %p375, %s374, 15
      %s377 = smul.addr %s376, 8
      %s378 = scalar_lea.vmem %s9, %s377
      %s379 = smul.u32 4, %s20
      %v380 = vld [vmem:[%s360] sm:$0xf]
      %v381 = vld [vmem:[%s360 + $0x4] sm:$0xf]
      %v382 = vld [vmem:[%s360 + $0x8] sm:$0xf]
      %v383 = vld [vmem:[%s360 + $0xc] sm:$0xf]
      %v384 = vunpack.c.l.bf16 %v380
      %v385 = vunpack.c.l.bf16 %v381
      %v386 = vunpack.c.l.bf16 %v382
      %v387 = vunpack.c.l.bf16 %v383
      %v388 = vld [vmem:[%s1] sm:$0xff]
      %v389 = vld [vmem:[%s1 + $0x8] sm:$0xff]
      %v390 = vld [vmem:[%s1 + $0x10] sm:$0xff]
      %v391 = vld [vmem:[%s1 + $0x18] sm:$0xff]
      %v392 = vld [vmem:[%s1 + $0x20] sm:$0xff]
      %v393 = vld [vmem:[%s1 + $0x28] sm:$0xff]
      %v394 = vld [vmem:[%s1 + $0x30] sm:$0xff]
      %v395 = vld [vmem:[%s1 + $0x38] sm:$0xff]
      %v396 = vld [vmem:[%s1 + $0x40] sm:$0xff]
      %v397 = vld [vmem:[%s1 + $0x48] sm:$0xff]
      %v398 = vld [vmem:[%s1 + $0x50] sm:$0xff]
      %v399 = vld [vmem:[%s1 + $0x58] sm:$0xff]
      %v400 = vld [vmem:[%s1 + $0x60] sm:$0xff]
      %v401 = vld [vmem:[%s1 + $0x68] sm:$0xff]
      %v402 = vld [vmem:[%s1 + $0x70] sm:$0xff]
      %v403 = vld [vmem:[%s1 + $0x78] sm:$0xff]
      %v404 = vld [vmem:[%s2] sm:$0x1]
      %v406 = vlaneseq
      %v407 = vshrl.u32 %v406, 7
      %v408 = vsub.s32 0, %v407
      %v409 = vrot.slane %v404, %v408
      %411 = vmatprep.subr.mxu0 0.0
      %412 = vmatpush1.msra.mxu0 %v388
      %413 = vmatprep.subr.mxu0 0.0
      %414 = vmatpush1.msra.mxu0 %v389
      %415 = vmatprep.subr.mxu0 0.0
      %416 = vmatpush1.msra.mxu0 %v390
      %417 = vmatprep.subr.mxu0 0.0
      %418 = vmatpush1.msra.mxu0 %v391
      %419 = vmatprep.subr.mxu0 0.0
      %420 = vmatpush1.msra.mxu0 %v392
      %421 = vmatprep.subr.mxu0 0.0
      %422 = vmatpush1.msra.mxu0 %v393
      %423 = vmatprep.subr.mxu0 0.0
      %424 = vmatpush1.msra.mxu0 %v394
      %425 = vmatprep.subr.mxu0 0.0
      %426 = vmatpush1.msra.mxu0 %v395
      %427 = vmatprep.subr.mxu0 0.0
      %428 = vmatpush1.msra.mxu0 %v396
      %429 = vmatprep.subr.mxu0 0.0
      %430 = vmatpush1.msra.mxu0 %v397
      %431 = vmatprep.subr.mxu0 0.0
      %432 = vmatpush1.msra.mxu0 %v398
      %433 = vmatprep.subr.mxu0 0.0
      %434 = vmatpush1.msra.mxu0 %v399
      %435 = vmatprep.subr.mxu0 0.0
      %436 = vmatpush1.msra.mxu0 %v400
      %437 = vmatprep.subr.mxu0 0.0
      %438 = vmatpush1.msra.mxu0 %v401
      %439 = vmatprep.subr.mxu0 0.0
      %440 = vmatpush1.msra.mxu0 %v402
      %441 = vmatprep.subr.mxu0 0.0
      %442 = vmatpush1.msra.mxu0 %v403
      %443 = vmatprep.subr.mxu0 0.0
      %444 = vmatpush1.msra.mxu0 0.0
      %445 = vmatprep.subr.mxu0 0.0
      %446 = vmatpush1.msra.mxu0 0.0
      %447 = vmatprep.subr.mxu0 0.0
      %448 = vmatpush1.msra.mxu0 0.0
      %449 = vmatprep.subr.mxu0 0.0
      %450 = vmatpush1.msra.mxu0 0.0
      %451 = vmatprep.subr.mxu0 0.0
      %452 = vmatpush1.msra.mxu0 0.0
      %453 = vmatprep.subr.mxu0 0.0
      %454 = vmatpush1.msra.mxu0 0.0
      %455 = vmatprep.subr.mxu0 0.0
      %456 = vmatpush1.msra.mxu0 0.0
      %457 = vmatprep.subr.mxu0 0.0
      %458 = vmatpush1.msra.mxu0 0.0
      %459 = vmatprep.subr.mxu0 0.0
      %460 = vmatpush1.msra.mxu0 0.0
      %461 = vmatprep.subr.mxu0 0.0
      %462 = vmatpush1.msra.mxu0 0.0
      %463 = vmatprep.subr.mxu0 0.0
      %464 = vmatpush1.msra.mxu0 0.0
      %465 = vmatprep.subr.mxu0 0.0
      %466 = vmatpush1.msra.mxu0 0.0
      %467 = vmatprep.subr.mxu0 0.0
      %468 = vmatpush1.msra.mxu0 0.0
      %469 = vmatprep.subr.mxu0 0.0
      %470 = vmatpush1.msra.mxu0 0.0
      %471 = vmatprep.subr.mxu0 0.0
      %472 = vmatpush1.msra.mxu0 0.0
      %473 = vmatprep.subr.mxu0 0.0
      %474 = vmatpush1.msra.mxu0 0.0
      %475 = vmatprep.mubr.f32.mxu0 0.0
      %476 = vmatmul.mubr.f32.gmra.mrb[0].mxu0 %v384
      %v477 = vpop.f32.mrb[0].mxu0
      %v478 = vadd.f32 %v409, %v477
      %v479 = vpop.f32.mrb[0].mxu0
      %480 = vmatprep.mubr.f32.mxu0 0.0
      %481 = vmatmul.mubr.f32.gmra.mrb[0].mxu0 %v385
      %v482 = vpop.f32.mrb[0].mxu0
      %v483 = vadd.f32 %v409, %v482
      %v484 = vpop.f32.mrb[0].mxu0
      %485 = vmatprep.mubr.f32.mxu0 0.0
      %486 = vmatmul.mubr.f32.gmra.mrb[0].mxu0 %v386
      %v487 = vpop.f32.mrb[0].mxu0
      %v488 = vadd.f32 %v409, %v487
      %v489 = vpop.f32.mrb[0].mxu0
      %490 = vmatprep.mubr.f32.mxu0 0.0
      %491 = vmatmul.mubr.f32.gmra.mrb[0].mxu0 %v387
      %v492 = vpop.f32.mrb[0].mxu0
      %v493 = vadd.f32 %v409, %v492
      %v494 = vpop.f32.mrb[0].mxu0
      %495 = vdwg.mxu0
      %v496 = vld [vmem:[%s366] sm:$0xff]
      %v497 = vld [vmem:[%s366 + $0x8] sm:$0xff]
      %v498 = vld [vmem:[%s366 + $0x10] sm:$0xff]
      %v499 = vld [vmem:[%s366 + $0x18] sm:$0xff]
      %v500 = vld [vmem:[%s5] sm:$0xff]
      %v501 = vld [vmem:[%s5 + $0x8] sm:$0xff]
      %v502 = vld [vmem:[%s5 + $0x10] sm:$0xff]
      %v503 = vld [vmem:[%s5 + $0x18] sm:$0xff]
      %v504 = vld [vmem:[%s372] sm:$0xff]
      %v505 = vld [vmem:[%s372 + $0x8] sm:$0xff]
      %v506 = vld [vmem:[%s372 + $0x10] sm:$0xff]
      %v507 = vld [vmem:[%s372 + $0x18] sm:$0xff]
      %v508 = vld [vmem:[%s6] sm:$0xff]
      %v509 = vld [vmem:[%s6 + $0x8] sm:$0xff]
      %v510 = vld [vmem:[%s6 + $0x10] sm:$0xff]
      %v511 = vld [vmem:[%s6 + $0x18] sm:$0xff]
      %vm512 = vcmask 261120
      %v514 = vsel %vm512, %v504, 0
      %v517 = vsel %vm512, %v505, 0
      %v520 = vsel %vm512, %v506, 0
      %v523 = vsel %vm512, %v507, 0
      %525 = vmatprep.subr.mxu0 0.0
      %526 = vmatpush1.msra.mxu0 %v508
      %527 = vmatprep.subr.mxu0 0.0
      %528 = vmatpush1.msra.mxu0 %v509
      %529 = vmatprep.subr.mxu0 0.0
      %530 = vmatpush1.msra.mxu0 %v510
      %531 = vmatprep.subr.mxu0 0.0
      %532 = vmatpush1.msra.mxu0 %v511
      %533 = vmatprep.subr.mxu0 0.0
      %534 = vmatpush1.msra.mxu0 0.0
      %535 = vmatprep.subr.mxu0 0.0
      %536 = vmatpush1.msra.mxu0 0.0
      %537 = vmatprep.subr.mxu0 0.0
      %538 = vmatpush1.msra.mxu0 0.0
      %539 = vmatprep.subr.mxu0 0.0
      %540 = vmatpush1.msra.mxu0 0.0
      %541 = vmatprep.subr.mxu0 0.0
      %542 = vmatpush1.msra.mxu0 0.0
      %543 = vmatprep.subr.mxu0 0.0
      %544 = vmatpush1.msra.mxu0 0.0
      %545 = vmatprep.subr.mxu0 0.0
      %546 = vmatpush1.msra.mxu0 0.0
      %547 = vmatprep.subr.mxu0 0.0
      %548 = vmatpush1.msra.mxu0 0.0
      %549 = vmatprep.subr.mxu0 0.0
      %550 = vmatpush1.msra.mxu0 0.0
      %551 = vmatprep.subr.mxu0 0.0
      %552 = vmatpush1.msra.mxu0 0.0
      %553 = vmatprep.subr.mxu0 0.0
      %554 = vmatpush1.msra.mxu0 0.0
      %555 = vmatprep.subr.mxu0 0.0
      %556 = vmatpush1.msra.mxu0 0.0
      %557 = vmatprep.subr.mxu0 0.0
      %558 = vmatpush1.msra.mxu0 0.0
      %559 = vmatprep.subr.mxu0 0.0
      %560 = vmatpush1.msra.mxu0 0.0
      %561 = vmatprep.subr.mxu0 0.0
      %562 = vmatpush1.msra.mxu0 0.0
      %563 = vmatprep.subr.mxu0 0.0
      %564 = vmatpush1.msra.mxu0 0.0
      %565 = vmatprep.subr.mxu0 0.0
      %566 = vmatpush1.msra.mxu0 0.0
      %567 = vmatprep.subr.mxu0 0.0
      %568 = vmatpush1.msra.mxu0 0.0
      %569 = vmatprep.subr.mxu0 0.0
      %570 = vmatpush1.msra.mxu0 0.0
      %571 = vmatprep.subr.mxu0 0.0
      %572 = vmatpush1.msra.mxu0 0.0
      %573 = vmatprep.subr.mxu0 0.0
      %574 = vmatpush1.msra.mxu0 0.0
      %575 = vmatprep.subr.mxu0 0.0
      %576 = vmatpush1.msra.mxu0 0.0
      %577 = vmatprep.subr.mxu0 0.0
      %578 = vmatpush1.msra.mxu0 0.0
      %579 = vmatprep.subr.mxu0 0.0
      %580 = vmatpush1.msra.mxu0 0.0
      %581 = vmatprep.subr.mxu0 0.0
      %582 = vmatpush1.msra.mxu0 0.0
      %583 = vmatprep.subr.mxu0 0.0
      %584 = vmatpush1.msra.mxu0 0.0
      %585 = vmatprep.subr.mxu0 0.0
      %586 = vmatpush1.msra.mxu0 0.0
      %587 = vmatprep.subr.mxu0 0.0
      %588 = vmatpush1.msra.mxu0 0.0
      %589 = vmatprep.mubr.f32.mxu0 0.0
      %590 = vmatmul.mubr.f32.gmra.mrb[0].mxu0 %v514
      %v591 = vpop.f32.mrb[0].mxu0
      %v592 = vadd.f32 0.0, %v591
      %v593 = vpop.f32.mrb[0].mxu0
      %594 = vmatprep.mubr.f32.mxu0 0.0
      %595 = vmatmul.mubr.f32.gmra.mrb[0].mxu0 %v517
      %v596 = vpop.f32.mrb[0].mxu0
      %v597 = vadd.f32 0.0, %v596
      %v598 = vpop.f32.mrb[0].mxu0
      %599 = vmatprep.mubr.f32.mxu0 0.0
      %600 = vmatmul.mubr.f32.gmra.mrb[0].mxu0 %v520
      %v601 = vpop.f32.mrb[0].mxu0
      %v602 = vadd.f32 0.0, %v601
      %v603 = vpop.f32.mrb[0].mxu0
      %604 = vmatprep.mubr.f32.mxu0 0.0
      %605 = vmatmul.mubr.f32.gmra.mrb[0].mxu0 %v523
      %v606 = vpop.f32.mrb[0].mxu0
      %v607 = vadd.f32 0.0, %v606
      %v608 = vpop.f32.mrb[0].mxu0
      %609 = vdwg.mxu0
      %v611 = vsel %vm512, %v496, 0
      %v614 = vsel %vm512, %v497, 0
      %v617 = vsel %vm512, %v498, 0
      %v620 = vsel %vm512, %v499, 0
      %622 = vmatprep.subr.mxu0 0.0
      %623 = vmatpush1.msra.mxu0 %v500
      %624 = vmatprep.subr.mxu0 0.0
      %625 = vmatpush1.msra.mxu0 %v501
      %626 = vmatprep.subr.mxu0 0.0
      %627 = vmatpush1.msra.mxu0 %v502
      %628 = vmatprep.subr.mxu0 0.0
      %629 = vmatpush1.msra.mxu0 %v503
      %630 = vmatprep.subr.mxu0 0.0
      %631 = vmatpush1.msra.mxu0 0.0
      %632 = vmatprep.subr.mxu0 0.0
      %633 = vmatpush1.msra.mxu0 0.0
      %634 = vmatprep.subr.mxu0 0.0
      %635 = vmatpush1.msra.mxu0 0.0
      %636 = vmatprep.subr.mxu0 0.0
      %637 = vmatpush1.msra.mxu0 0.0
      %638 = vmatprep.subr.mxu0 0.0
      %639 = vmatpush1.msra.mxu0 0.0
      %640 = vmatprep.subr.mxu0 0.0
      %641 = vmatpush1.msra.mxu0 0.0
      %642 = vmatprep.subr.mxu0 0.0
      %643 = vmatpush1.msra.mxu0 0.0
      %644 = vmatprep.subr.mxu0 0.0
      %645 = vmatpush1.msra.mxu0 0.0
      %646 = vmatprep.subr.mxu0 0.0
      %647 = vmatpush1.msra.mxu0 0.0
      %648 = vmatprep.subr.mxu0 0.0
      %649 = vmatpush1.msra.mxu0 0.0
      %650 = vmatprep.subr.mxu0 0.0
      %651 = vmatpush1.msra.mxu0 0.0
      %652 = vmatprep.subr.mxu0 0.0
      %653 = vmatpush1.msra.mxu0 0.0
      %654 = vmatprep.subr.mxu0 0.0
      %655 = vmatpush1.msra.mxu0 0.0
      %656 = vmatprep.subr.mxu0 0.0
      %657 = vmatpush1.msra.mxu0 0.0
      %658 = vmatprep.subr.mxu0 0.0
      %659 = vmatpush1.msra.mxu0 0.0
      %660 = vmatprep.subr.mxu0 0.0
      %661 = vmatpush1.msra.mxu0 0.0
      %662 = vmatprep.subr.mxu0 0.0
      %663 = vmatpush1.msra.mxu0 0.0
      %664 = vmatprep.subr.mxu0 0.0
      %665 = vmatpush1.msra.mxu0 0.0
      %666 = vmatprep.subr.mxu0 0.0
      %667 = vmatpush1.msra.mxu0 0.0
      %668 = vmatprep.subr.mxu0 0.0
      %669 = vmatpush1.msra.mxu0 0.0
      %670 = vmatprep.subr.mxu0 0.0
      %671 = vmatpush1.msra.mxu0 0.0
      %672 = vmatprep.subr.mxu0 0.0
      %673 = vmatpush1.msra.mxu0 0.0
      %674 = vmatprep.subr.mxu0 0.0
      %675 = vmatpush1.msra.mxu0 0.0
      %676 = vmatprep.subr.mxu0 0.0
      %677 = vmatpush1.msra.mxu0 0.0
      %678 = vmatprep.subr.mxu0 0.0
      %679 = vmatpush1.msra.mxu0 0.0
      %680 = vmatprep.subr.mxu0 0.0
      %681 = vmatpush1.msra.mxu0 0.0
      %682 = vmatprep.subr.mxu0 0.0
      %683 = vmatpush1.msra.mxu0 0.0
      %684 = vmatprep.subr.mxu0 0.0
      %685 = vmatpush1.msra.mxu0 0.0
      %686 = vmatprep.mubr.f32.mxu0 0.0
      %687 = vmatmul.mubr.f32.gmra.mrb[0].mxu0 %v611
      %v688 = vpop.f32.mrb[0].mxu0
      %v689 = vadd.f32 %v592, %v688
      %v690 = vpop.f32.mrb[0].mxu0
      %691 = vmatprep.mubr.f32.mxu0 0.0
      %692 = vmatmul.mubr.f32.gmra.mrb[0].mxu0 %v614
      %v693 = vpop.f32.mrb[0].mxu0
      %v694 = vadd.f32 %v597, %v693
      %v695 = vpop.f32.mrb[0].mxu0
      %696 = vmatprep.mubr.f32.mxu0 0.0
      %697 = vmatmul.mubr.f32.gmra.mrb[0].mxu0 %v617
      %v698 = vpop.f32.mrb[0].mxu0
      %v699 = vadd.f32 %v602, %v698
      %v700 = vpop.f32.mrb[0].mxu0
      %701 = vmatprep.mubr.f32.mxu0 0.0
      %702 = vmatmul.mubr.f32.gmra.mrb[0].mxu0 %v620
      %v703 = vpop.f32.mrb[0].mxu0
      %v704 = vadd.f32 %v607, %v703
      %v705 = vpop.f32.mrb[0].mxu0
      %706 = vdwg.mxu0
      %v707 = vld [vmem:[%s7] sm:$0xff]
      %v708 = vld [vmem:[%s7 + $0x8] sm:$0xff]
      %vm709 = vcmask 130048
      %v711 = vsel %vm709, %v478, 0
      %v714 = vsel %vm709, %v483, 0
      %v717 = vsel %vm709, %v488, 0
      %v720 = vsel %vm709, %v493, 0
      %722 = vmatprep.subr.mxu0 0.0
      %723 = vmatpush1.msra.mxu0 %v707
      %724 = vmatprep.subr.mxu0 0.0
      %725 = vmatpush1.msra.mxu0 %v708
      %726 = vmatprep.subr.mxu0 0.0
      %727 = vmatpush1.msra.mxu0 0.0
      %728 = vmatprep.subr.mxu0 0.0
      %729 = vmatpush1.msra.mxu0 0.0
      %730 = vmatprep.subr.mxu0 0.0
      %731 = vmatpush1.msra.mxu0 0.0
      %732 = vmatprep.subr.mxu0 0.0
      %733 = vmatpush1.msra.mxu0 0.0
      %734 = vmatprep.subr.mxu0 0.0
      %735 = vmatpush1.msra.mxu0 0.0
      %736 = vmatprep.subr.mxu0 0.0
      %737 = vmatpush1.msra.mxu0 0.0
      %738 = vmatprep.subr.mxu0 0.0
      %739 = vmatpush1.msra.mxu0 0.0
      %740 = vmatprep.subr.mxu0 0.0
      %741 = vmatpush1.msra.mxu0 0.0
      %742 = vmatprep.subr.mxu0 0.0
      %743 = vmatpush1.msra.mxu0 0.0
      %744 = vmatprep.subr.mxu0 0.0
      %745 = vmatpush1.msra.mxu0 0.0
      %746 = vmatprep.subr.mxu0 0.0
      %747 = vmatpush1.msra.mxu0 0.0
      %748 = vmatprep.subr.mxu0 0.0
      %749 = vmatpush1.msra.mxu0 0.0
      %750 = vmatprep.subr.mxu0 0.0
      %751 = vmatpush1.msra.mxu0 0.0
      %752 = vmatprep.subr.mxu0 0.0
      %753 = vmatpush1.msra.mxu0 0.0
      %754 = vmatprep.subr.mxu0 0.0
      %755 = vmatpush1.msra.mxu0 0.0
      %756 = vmatprep.subr.mxu0 0.0
      %757 = vmatpush1.msra.mxu0 0.0
      %758 = vmatprep.subr.mxu0 0.0
      %759 = vmatpush1.msra.mxu0 0.0
      %760 = vmatprep.subr.mxu0 0.0
      %761 = vmatpush1.msra.mxu0 0.0
      %762 = vmatprep.subr.mxu0 0.0
      %763 = vmatpush1.msra.mxu0 0.0
      %764 = vmatprep.subr.mxu0 0.0
      %765 = vmatpush1.msra.mxu0 0.0
      %766 = vmatprep.subr.mxu0 0.0
      %767 = vmatpush1.msra.mxu0 0.0
      %768 = vmatprep.subr.mxu0 0.0
      %769 = vmatpush1.msra.mxu0 0.0
      %770 = vmatprep.subr.mxu0 0.0
      %771 = vmatpush1.msra.mxu0 0.0
      %772 = vmatprep.subr.mxu0 0.0
      %773 = vmatpush1.msra.mxu0 0.0
      %774 = vmatprep.subr.mxu0 0.0
      %775 = vmatpush1.msra.mxu0 0.0
      %776 = vmatprep.subr.mxu0 0.0
      %777 = vmatpush1.msra.mxu0 0.0
      %778 = vmatprep.subr.mxu0 0.0
      %779 = vmatpush1.msra.mxu0 0.0
      %780 = vmatprep.subr.mxu0 0.0
      %781 = vmatpush1.msra.mxu0 0.0
      %782 = vmatprep.subr.mxu0 0.0
      %783 = vmatpush1.msra.mxu0 0.0
      %784 = vmatprep.subr.mxu0 0.0
      %785 = vmatpush1.msra.mxu0 0.0
      %786 = vmatprep.mubr.f32.mxu0 0.0
      %787 = vmatmul.mubr.f32.gmra.mrb[0].mxu0 %v711
      %v788 = vpop.f32.mrb[0].mxu0
      %v789 = vadd.f32 0.0, %v788
      %v790 = vpop.f32.mrb[0].mxu0
      %791 = vmatprep.mubr.f32.mxu0 0.0
      %792 = vmatmul.mubr.f32.gmra.mrb[0].mxu0 %v714
      %v793 = vpop.f32.mrb[0].mxu0
      %v794 = vadd.f32 0.0, %v793
      %v795 = vpop.f32.mrb[0].mxu0
      %796 = vmatprep.mubr.f32.mxu0 0.0
      %797 = vmatmul.mubr.f32.gmra.mrb[0].mxu0 %v717
      %v798 = vpop.f32.mrb[0].mxu0
      %v799 = vadd.f32 0.0, %v798
      %v800 = vpop.f32.mrb[0].mxu0
      %801 = vmatprep.mubr.f32.mxu0 0.0
      %802 = vmatmul.mubr.f32.gmra.mrb[0].mxu0 %v720
      %v803 = vpop.f32.mrb[0].mxu0
      %v804 = vadd.f32 0.0, %v803
      %v805 = vpop.f32.mrb[0].mxu0
      %806 = vdwg.mxu0
      %v807 = vadd.f32 %v689, %v789
      %v808 = vadd.f32 %v694, %v794
      %v809 = vadd.f32 %v699, %v799
      %v810 = vadd.f32 %v704, %v804
      %v811 = vld [vmem:[%s8] sm:$0x1]
      %v813 = vlaneseq
      %v814 = vshrl.u32 %v813, 7
      %v815 = vsub.s32 0, %v814
      %v816 = vrot.slane %v811, %v815
      %v818 = vadd.f32 %v807, %v816
      %v819 = vadd.f32 %v808, %v816
      %v820 = vadd.f32 %v809, %v816
      %v821 = vadd.f32 %v810, %v816
      %v822 = vlaneseq
      %v823 = vand.u32 %v822, 127
      %vm824 = vcmp.lt.s32.totalorder %v823, 4
      %v825 = vsel %vm824, %v818, -inf
      %v826 = vsel %vm824, %v819, -inf
      %v827 = vsel %vm824, %v820, -inf
      %v828 = vsel %vm824, %v821, -inf
      %829 = vmax.xlane.f32.xlu0 %v825
      %v830 = vpop.xlane.xlu0 %829
      %831 = vmax.xlane.f32.xlu0 %v826
      %v832 = vpop.xlane.xlu0 %831
      %833 = vmax.xlane.f32.xlu0 %v827
      %v834 = vpop.xlane.xlu0 %833
      %835 = vmax.xlane.f32.xlu0 %v828
      %v836 = vpop.xlane.xlu0 %835
      %v837 = vsub.f32 %v825, %v830
      %v838 = vsub.f32 %v826, %v832
      %v839 = vsub.f32 %v827, %v834
      %v840 = vsub.f32 %v828, %v836
      %v841 = vmul.f32 %v837, 1.442695
      %v842 = vpow.pop %v841
      %v843 = vmul.f32 %v838, 1.442695
      %v844 = vpow.pop %v843
      %v845 = vmul.f32 %v839, 1.442695
      %v846 = vpow.pop %v845
      %v847 = vmul.f32 %v840, 1.442695
      %v848 = vpow.pop %v847
      %849 = vadd.xlane.f32.xlu0 %v842
      %v850 = vpop.xlane.xlu0 %849
      %851 = vadd.xlane.f32.xlu0 %v844
      %v852 = vpop.xlane.xlu0 %851
      %853 = vadd.xlane.f32.xlu0 %v846
      %v854 = vpop.xlane.xlu0 %853
      %855 = vadd.xlane.f32.xlu0 %v848
      %v856 = vpop.xlane.xlu0 %855
      %v857 = vlog2.pop %v850
      %v858 = vmul.f32 %v857, 0.6931472
      %v859 = vlog2.pop %v852
      %v860 = vmul.f32 %v859, 0.6931472
      %v861 = vlog2.pop %v854
      %v862 = vmul.f32 %v861, 0.6931472
      %v863 = vlog2.pop %v856
      %v864 = vmul.f32 %v863, 0.6931472
      %v865 = vsub.f32 %v818, %v830
      %v866 = vsub.f32 %v819, %v832
      %v867 = vsub.f32 %v820, %v834
      %v868 = vsub.f32 %v821, %v836
      %v869 = vsub.f32 %v865, %v858
      %v870 = vsub.f32 %v866, %v860
      %v871 = vsub.f32 %v867, %v862
      %v872 = vsub.f32 %v868, %v864
      %873 = vst [vmem:[%s378] sm:$0xff] %v869
      %874 = vst [vmem:[%s378 + $0x8] sm:$0xff] %v870
      %875 = vst [vmem:[%s378 + $0x10] sm:$0xff] %v871
      %876 = vst [vmem:[%s378 + $0x18] sm:$0xff] %v872
      %s877 = smul.u32 4, %s20
      %p878 = scmp.lt.s32.totalorder %s877, 15
      %s879 = scalar_select %p878, %s877, 15
      %s880 = smul.addr %s879, 8
      %s881 = scalar_lea.vmem %s9, %s880
      // Predicated region
      $region57: #{gcn_synthetic_forward.5} parent=55 // pred_check
        %p882 = pneg %p242
      $region58: #{gcn_synthetic_forward.5} parent=55 // pred_check_branch
        %884 = sbr.rel (%p882) target = $region60
      $region59: #{gcn_synthetic_forward.5} parent=55 // pred_region
        %s885 = smul.u32 4, %s20
      $region60: #{gcn_synthetic_forward.5} parent=55 // pred_fallthru
        _
    $region56: #{gcn_synthetic_forward.5} parent=5 // pred_fallthru
      _
    %p886 = scmp.le.s32.totalorder 2, %s15
    // Predicated region
    $region61: #{gcn_synthetic_forward.5} parent=5 // pred_check
      %p887 = pneg %p886
    $region62: #{gcn_synthetic_forward.5} parent=5 // pred_check_branch
      %889 = sbr.rel (%p887) target = $region64
    $region63: #{gcn_synthetic_forward.5} parent=5 // pred_region
      %s890 = ssub.s32 %s15, 2
      // Predicated region
      $region65: #{gcn_synthetic_forward.5} parent=63 // pred_check
        %p891 = pneg %p248
      $region66: #{gcn_synthetic_forward.5} parent=63 // pred_check_branch
        %893 = sbr.rel (%p891) target = $region68
      $region67: #{gcn_synthetic_forward.5} parent=63 // pred_region
        %s894 = smul.u32 4, %s21
        %p895 = scmp.lt.s32.totalorder %s894, 15
        %s896 = scalar_select %p895, %s894, 15
        %s897 = smul.addr %s896, 8
        %s898 = scalar_lea.vmem %s9, %s897
      $region68: #{gcn_synthetic_forward.5} parent=63 // pred_fallthru
        _
    $region64: #{gcn_synthetic_forward.5} parent=5 // pred_fallthru
      _
  $region6: #{gcn_synthetic_forward.5} parent=0 // loop_footer
    %s19 = sadd.s32 1, %s15
  $region7: #{gcn_synthetic_forward.5} parent=0 // loop_footer_branch
    %14 = sbr.rel target = $region3
  $region8: #{gcn_synthetic_forward.5} parent=0 // loop_exit
    _

// kernel: gcn_synthetic_forward.3
$region0: #{gcn_synthetic_forward.3}
  #allocation0 [shape = 'u32[]', space=smem, size = 0x4, offset = 0x4, fixed_abs, tag = 'smem constant byte address 0x4 - core index']
  #allocation1 [shape = 'u32[144,128]{1,0:T(1,128)}', space=vmem, size = 0x12000, scoped, tag = 'internal scratch']
  %s0 = inlined_call_operand.vmem [shape: bf16[128,128], index: 0, kind: input, shape index: {}]
  %s1 = inlined_call_operand.vmem [shape: f32[128,16], index: 1, kind: input, shape index: {}]
  %s2 = inlined_call_operand.vmem [shape: f32[16,32], index: 2, kind: input, shape index: {}]
  %s3 = inlined_call_operand.vmem [shape: f32[1,32], index: 3, kind: input, shape index: {}]
  %s4 = inlined_call_operand.vmem [shape: f32[32,32], index: 4, kind: input, shape index: {}]
  %s5 = inlined_call_operand.vmem [shape: f32[128,32], index: 5, kind: output, shape index: {0}]
  %s6 = inlined_call_operand.vmem [shape: f32[128,32], index: 6, kind: output, shape index: {1}]
  %7 = xla_tuple %s5, %s6
  %s8 = sld [smem:[#allocation0]]
  $region61: #{gcn_synthetic_forward.3} parent=0
    _
  %s10 = ssub.s32 1, %s8
  %s11 = scalar_select 0, %s10, %s8
  loop: start=0, step=1, limit=6
  $region2: #{gcn_synthetic_forward.3} parent=0 // loop_pre_header
    _
  $region3: #{gcn_synthetic_forward.3} parent=0 // loop_header
    %s13 = sphi 0, %s17
    %p14 = scmp.ge.s32.totalorder %s13, 6
    %s23 = sphi 0, %s25
    %s26 = sphi 0, %s23
    %s27 = sphi 0, %s26
    %s43 = sphi 0, %s27
    %s47 = sphi 0, %s47
    %s49 = sphi 0, %s47
    %s50 = sphi 0, %s49
    %s64 = sphi 0, %s50
    %s68 = sphi 0, %s68
    %s70 = sphi 0, %s68
    %s71 = sphi 0, %s70
    %s85 = sphi 0, %s71
    %s89 = sphi 0, %s89
    %s91 = sphi 0, %s89
    %s92 = sphi 0, %s91
    %s106 = sphi 0, %s92
    %s110 = sphi 0, %s110
    %s112 = sphi 0, %s110
    %s113 = sphi 0, %s112
    %s127 = sphi 0, %s113
    %s133 = sphi 0, %s135
    %s136 = sphi 0, %s133
    %s137 = sphi 0, %s136
    %s153 = sphi 0, %s137
    %s159 = sphi 0, %s161
    %s162 = sphi 0, %s159
    %s163 = sphi 0, %s162
    %s179 = sphi 0, %s163
  $region4: #{gcn_synthetic_forward.3} parent=0 // loop_header_branch
    %16 = sbr.rel (%p14) target = $region8
  $region5: #{gcn_synthetic_forward.3} parent=0 // loop_body
    %s18 = ssub.s32 %s13, 1
    %s19 = ssub.s32 %s13, 2
    %s20 = sadd.s32 %s13, 1
    %s21 = ssub.s32 %s13, %s20
    %p22 = scmp.eq.s32.totalorder %s21, 0
    %s24 = sadd.s32 %s23, 1
    %s25 = scalar_select %p22, %s23, %s24
    %p28 = pneg %p22
    %p29 = scmp.eq.s32.totalorder %s13, 3
    %p30 = por %p28, %p29
    %p31 = scmp.ne.s32.totalorder %s23, %s26
    %p32 = scmp.eq.s32.totalorder %s13, 0
    %p33 = por %p31, %p32
    %p34 = scmp.ne.s32.totalorder %s23, %s26
    %p35 = scmp.eq.s32.totalorder %s18, 3
    %p36 = por %p34, %p35
    %p37 = scmp.ne.s32.totalorder %s26, %s27
    %p38 = scmp.eq.s32.totalorder %s18, 0
    %p39 = por %p37, %p38
    %p40 = scmp.ne.s32.totalorder %s26, %s27
    %p41 = scmp.eq.s32.totalorder %s19, 3
    %p42 = por %p40, %p41
    %p44 = scmp.ne.s32.totalorder %s27, %s43
    %p45 = scmp.eq.s32.totalorder %s19, 0
    %p46 = por %p44, %p45
    %s48 = sadd.s32 %s47, 1
    %p51 = scmp.eq.s32.totalorder %s13, 3
    %p52 = scmp.ne.s32.totalorder %s47, %s49
    %p53 = scmp.eq.s32.totalorder %s13, 0
    %p54 = por %p52, %p53
    %p55 = scmp.ne.s32.totalorder %s47, %s49
    %p56 = scmp.eq.s32.totalorder %s18, 3
    %p57 = por %p55, %p56
    %p58 = scmp.ne.s32.totalorder %s49, %s50
    %p59 = scmp.eq.s32.totalorder %s18, 0
    %p60 = por %p58, %p59
    %p61 = scmp.ne.s32.totalorder %s49, %s50
    %p62 = scmp.eq.s32.totalorder %s19, 3
    %p63 = por %p61, %p62
    %p65 = scmp.ne.s32.totalorder %s50, %s64
    %p66 = scmp.eq.s32.totalorder %s19, 0
    %p67 = por %p65, %p66
    %s69 = sadd.s32 %s68, 1
    %p72 = scmp.eq.s32.totalorder %s13, 3
    %p73 = scmp.ne.s32.totalorder %s68, %s70
    %p74 = scmp.eq.s32.totalorder %s13, 0
    %p75 = por %p73, %p74
    %p76 = scmp.ne.s32.totalorder %s68, %s70
    %p77 = scmp.eq.s32.totalorder %s18, 3
    %p78 = por %p76, %p77
    %p79 = scmp.ne.s32.totalorder %s70, %s71
    %p80 = scmp.eq.s32.totalorder %s18, 0
    %p81 = por %p79, %p80
    %p82 = scmp.ne.s32.totalorder %s70, %s71
    %p83 = scmp.eq.s32.totalorder %s19, 3
    %p84 = por %p82, %p83
    %p86 = scmp.ne.s32.totalorder %s71, %s85
    %p87 = scmp.eq.s32.totalorder %s19, 0
    %p88 = por %p86, %p87
    %s90 = sadd.s32 %s89, 1
    %p93 = scmp.eq.s32.totalorder %s13, 3
    %p94 = scmp.ne.s32.totalorder %s89, %s91
    %p95 = scmp.eq.s32.totalorder %s13, 0
    %p96 = por %p94, %p95
    %p97 = scmp.ne.s32.totalorder %s89, %s91
    %p98 = scmp.eq.s32.totalorder %s18, 3
    %p99 = por %p97, %p98
    %p100 = scmp.ne.s32.totalorder %s91, %s92
    %p101 = scmp.eq.s32.totalorder %s18, 0
    %p102 = por %p100, %p101
    %p103 = scmp.ne.s32.totalorder %s91, %s92
    %p104 = scmp.eq.s32.totalorder %s19, 3
    %p105 = por %p103, %p104
    %p107 = scmp.ne.s32.totalorder %s92, %s106
    %p108 = scmp.eq.s32.totalorder %s19, 0
    %p109 = por %p107, %p108
    %s111 = sadd.s32 %s110, 1
    %p114 = scmp.eq.s32.totalorder %s13, 3
    %p115 = scmp.ne.s32.totalorder %s110, %s112
    %p116 = scmp.eq.s32.totalorder %s13, 0
    %p117 = por %p115, %p116
    %p118 = scmp.ne.s32.totalorder %s110, %s112
    %p119 = scmp.eq.s32.totalorder %s18, 3
    %p120 = por %p118, %p119
    %p121 = scmp.ne.s32.totalorder %s112, %s113
    %p122 = scmp.eq.s32.totalorder %s18, 0
    %p123 = por %p121, %p122
    %p124 = scmp.ne.s32.totalorder %s112, %s113
    %p125 = scmp.eq.s32.totalorder %s19, 3
    %p126 = por %p124, %p125
    %p128 = scmp.ne.s32.totalorder %s113, %s127
    %p129 = scmp.eq.s32.totalorder %s19, 0
    %p130 = por %p128, %p129
    %s131 = ssub.s32 %s13, %s20
    %p132 = scmp.eq.s32.totalorder %s131, 0
    %s134 = sadd.s32 %s133, 1
    %s135 = scalar_select %p132, %s133, %s134
    %p138 = pneg %p132
    %p139 = scmp.eq.s32.totalorder %s13, 3
    %p140 = por %p138, %p139
    %p141 = scmp.ne.s32.totalorder %s133, %s136
    %p142 = scmp.eq.s32.totalorder %s13, 0
    %p143 = por %p141, %p142
    %p144 = scmp.ne.s32.totalorder %s133, %s136
    %p145 = scmp.eq.s32.totalorder %s18, 3
    %p146 = por %p144, %p145
    %p147 = scmp.ne.s32.totalorder %s136, %s137
    %p148 = scmp.eq.s32.totalorder %s18, 0
    %p149 = por %p147, %p148
    %p150 = scmp.ne.s32.totalorder %s136, %s137
    %p151 = scmp.eq.s32.totalorder %s19, 3
    %p152 = por %p150, %p151
    %p154 = scmp.ne.s32.totalorder %s137, %s153
    %p155 = scmp.eq.s32.totalorder %s19, 0
    %p156 = por %p154, %p155
    %s157 = ssub.s32 %s13, %s20
    %p158 = scmp.eq.s32.totalorder %s157, 0
    %s160 = sadd.s32 %s159, 1
    %s161 = scalar_select %p158, %s159, %s160
    %p164 = pneg %p158
    %p165 = scmp.eq.s32.totalorder %s13, 3
    %p166 = por %p164, %p165
    %p167 = scmp.ne.s32.totalorder %s159, %s162
    %p168 = scmp.eq.s32.totalorder %s13, 0
    %p169 = por %p167, %p168
    %p170 = scmp.ne.s32.totalorder %s159, %s162
    %p171 = scmp.eq.s32.totalorder %s18, 3
    %p172 = por %p170, %p171
    %p173 = scmp.ne.s32.totalorder %s162, %s163
    %p174 = scmp.eq.s32.totalorder %s18, 0
    %p175 = por %p173, %p174
    %p176 = scmp.ne.s32.totalorder %s162, %s163
    %p177 = scmp.eq.s32.totalorder %s19, 3
    %p178 = por %p176, %p177
    %p180 = scmp.ne.s32.totalorder %s163, %s179
    %p181 = scmp.eq.s32.totalorder %s19, 0
    %p182 = por %p180, %p181
    %p183 = scmp.le.s32.totalorder 1, %s13
    %p184 = scmp.lt.s32.totalorder %s13, 5
    %p185 = pnand %p183, %p184
    %p186 = pneg %p185
    // Predicated region
    $region9: #{gcn_synthetic_forward.3} parent=5 // pred_check
      _
    $region10: #{gcn_synthetic_forward.3} parent=5 // pred_check_branch
      %188 = sbr.rel (%p185) target = $region12
    $region11: #{gcn_synthetic_forward.3} parent=5 // pred_region
      %s189 = ssub.s32 %s13, 1
      // Predicated region
      $region13: #{gcn_synthetic_forward.3} parent=11 // pred_check
        %p190 = pneg %p60
      $region14: #{gcn_synthetic_forward.3} parent=11 // pred_check_branch
        %192 = sbr.rel (%p190) target = $region16
      $region15: #{gcn_synthetic_forward.3} parent=11 // pred_region
        _
      $region16: #{gcn_synthetic_forward.3} parent=11 // pred_fallthru
        _
      // Predicated region
      $region17: #{gcn_synthetic_forward.3} parent=11 // pred_check
        %p193 = pneg %p81
      $region18: #{gcn_synthetic_forward.3} parent=11 // pred_check_branch
        %195 = sbr.rel (%p193) target = $region20
      $region19: #{gcn_synthetic_forward.3} parent=11 // pred_region
        _
      $region20: #{gcn_synthetic_forward.3} parent=11 // pred_fallthru
        _
      // Predicated region
      $region21: #{gcn_synthetic_forward.3} parent=11 // pred_check
        %p196 = pneg %p102
      $region22: #{gcn_synthetic_forward.3} parent=11 // pred_check_branch
        %198 = sbr.rel (%p196) target = $region24
      $region23: #{gcn_synthetic_forward.3} parent=11 // pred_region
        _
      $region24: #{gcn_synthetic_forward.3} parent=11 // pred_fallthru
        _
      // Predicated region
      $region25: #{gcn_synthetic_forward.3} parent=11 // pred_check
        %p199 = pneg %p123
      $region26: #{gcn_synthetic_forward.3} parent=11 // pred_check_branch
        %201 = sbr.rel (%p199) target = $region28
      $region27: #{gcn_synthetic_forward.3} parent=11 // pred_region
        _
      $region28: #{gcn_synthetic_forward.3} parent=11 // pred_fallthru
        _
    $region12: #{gcn_synthetic_forward.3} parent=5 // pred_fallthru
      _
    %p202 = scmp.lt.s32.totalorder %s13, 4
    // Predicated region
    $region29: #{gcn_synthetic_forward.3} parent=5 // pred_check
      %p203 = pneg %p202
    $region30: #{gcn_synthetic_forward.3} parent=5 // pred_check_branch
      %205 = sbr.rel (%p203) target = $region32
    $region31: #{gcn_synthetic_forward.3} parent=5 // pred_region
      // Predicated region
      $region33: #{gcn_synthetic_forward.3} parent=31 // pred_check
        %p206 = pneg %p33
      $region34: #{gcn_synthetic_forward.3} parent=31 // pred_check_branch
        %208 = sbr.rel (%p206) target = $region36
      $region35: #{gcn_synthetic_forward.3} parent=31 // pred_region
        %s209 = smul.u32 4, %s13
        %p210 = scmp.lt.s32.totalorder %s209, 15
        %s211 = scalar_select %p210, %s209, 15
        %s212 = smul.addr %s211, 4
        %s213 = scalar_lea.vmem %s0, %s212
        %s214 = smul.u32 4, %s13
      $region36: #{gcn_synthetic_forward.3} parent=31 // pred_fallthru
        _
    $region32: #{gcn_synthetic_forward.3} parent=5 // pred_fallthru
      _
    %p215 = scmp.le.s32.totalorder 1, %s13
    %p216 = scmp.lt.s32.totalorder %s13, 5
    %p217 = pnand %p215, %p216
    %p218 = pneg %p217
    // Predicated region
    $region37: #{gcn_synthetic_forward.3} parent=5 // pred_check
      _
    $region38: #{gcn_synthetic_forward.3} parent=5 // pred_check_branch
      %220 = sbr.rel (%p217) target = $region40
    $region39: #{gcn_synthetic_forward.3} parent=5 // pred_region
      %s221 = ssub.s32 %s13, 1
      %s222 = smul.u32 4, %s18
      %p223 = scmp.lt.s32.totalorder %s222, 15
      %s224 = scalar_select %p223, %s222, 15
      %s225 = smul.addr %s224, 4
      %s226 = scalar_lea.vmem %s0, %s225
      %p227 = pneg %p39
      %p228 = pneg %p36
      %p229 = pneg %p60
      %p230 = pneg %p57
      %p231 = pneg %p81
      %p232 = pneg %p78
      %p233 = pneg %p102
      %p234 = pneg %p99
      %p235 = pneg %p123
      %p236 = pneg %p120
      %p237 = pneg %p149
      %p238 = pneg %p146
      %s239 = smul.u32 4, %s18
      %p240 = scmp.lt.s32.totalorder %s239, 15
      %s241 = scalar_select %p240, %s239, 15
      %s242 = smul.addr %s241, 8
      %s243 = scalar_lea.vmem %s5, %s242
      %p244 = pneg %p175
      %p245 = pneg %p172
      %s246 = smul.u32 4, %s18
      %p247 = scmp.lt.s32.totalorder %s246, 15
      %s248 = scalar_select %p247, %s246, 15
      %s249 = smul.addr %s248, 8
      %s250 = scalar_lea.vmem %s6, %s249
      %s251 = smul.u32 4, %s18
      %p252 = scmp.lt.s32.totalorder %s251, 15
      %s253 = scalar_select %p252, %s251, 15
      %s254 = smul.addr %s253, 4
      %s255 = scalar_lea.vmem %s0, %s254
      %s256 = smul.u32 4, %s18
      %s257 = smul.u32 4, %s18
      %p258 = scmp.lt.s32.totalorder %s257, 15
      %s259 = scalar_select %p258, %s257, 15
      %s260 = smul.addr %s259, 8
      %s261 = scalar_lea.vmem %s5, %s260
      %s262 = smul.u32 4, %s18
      %s263 = smul.u32 4, %s18
      %p264 = scmp.lt.s32.totalorder %s263, 15
      %s265 = scalar_select %p264, %s263, 15
      %s266 = smul.addr %s265, 8
      %s267 = scalar_lea.vmem %s6, %s266
      %s268 = smul.u32 4, %s18
      %v269 = vld [vmem:[%s255] sm:$0xf]
      %v270 = vld [vmem:[%s255 + $0x4] sm:$0xf]
      %v271 = vld [vmem:[%s255 + $0x8] sm:$0xf]
      %v272 = vld [vmem:[%s255 + $0xc] sm:$0xf]
      %v273 = vunpack.c.l.bf16 %v269
      %v274 = vunpack.c.l.bf16 %v270
      %v275 = vunpack.c.l.bf16 %v271
      %v276 = vunpack.c.l.bf16 %v272
      %v277 = vld [vmem:[%s1] sm:$0xff]
      %v278 = vld [vmem:[%s1 + $0x8] sm:$0xff]
      %v279 = vld [vmem:[%s1 + $0x10] sm:$0xff]
      %v280 = vld [vmem:[%s1 + $0x18] sm:$0xff]
      %v281 = vld [vmem:[%s1 + $0x20] sm:$0xff]
      %v282 = vld [vmem:[%s1 + $0x28] sm:$0xff]
      %v283 = vld [vmem:[%s1 + $0x30] sm:$0xff]
      %v284 = vld [vmem:[%s1 + $0x38] sm:$0xff]
      %v285 = vld [vmem:[%s1 + $0x40] sm:$0xff]
      %v286 = vld [vmem:[%s1 + $0x48] sm:$0xff]
      %v287 = vld [vmem:[%s1 + $0x50] sm:$0xff]
      %v288 = vld [vmem:[%s1 + $0x58] sm:$0xff]
      %v289 = vld [vmem:[%s1 + $0x60] sm:$0xff]
      %v290 = vld [vmem:[%s1 + $0x68] sm:$0xff]
      %v291 = vld [vmem:[%s1 + $0x70] sm:$0xff]
      %v292 = vld [vmem:[%s1 + $0x78] sm:$0xff]
      %293 = vmatprep.subr.mxu0 0.0
      %294 = vmatpush1.msra.mxu0 %v277
      %295 = vmatprep.subr.mxu0 0.0
      %296 = vmatpush1.msra.mxu0 %v278
      %297 = vmatprep.subr.mxu0 0.0
      %298 = vmatpush1.msra.mxu0 %v279
      %299 = vmatprep.subr.mxu0 0.0
      %300 = vmatpush1.msra.mxu0 %v280
      %301 = vmatprep.subr.mxu0 0.0
      %302 = vmatpush1.msra.mxu0 %v281
      %303 = vmatprep.subr.mxu0 0.0
      %304 = vmatpush1.msra.mxu0 %v282
      %305 = vmatprep.subr.mxu0 0.0
      %306 = vmatpush1.msra.mxu0 %v283
      %307 = vmatprep.subr.mxu0 0.0
      %308 = vmatpush1.msra.mxu0 %v284
      %309 = vmatprep.subr.mxu0 0.0
      %310 = vmatpush1.msra.mxu0 %v285
      %311 = vmatprep.subr.mxu0 0.0
      %312 = vmatpush1.msra.mxu0 %v286
      %313 = vmatprep.subr.mxu0 0.0
      %314 = vmatpush1.msra.mxu0 %v287
      %315 = vmatprep.subr.mxu0 0.0
      %316 = vmatpush1.msra.mxu0 %v288
      %317 = vmatprep.subr.mxu0 0.0
      %318 = vmatpush1.msra.mxu0 %v289
      %319 = vmatprep.subr.mxu0 0.0
      %320 = vmatpush1.msra.mxu0 %v290
      %321 = vmatprep.subr.mxu0 0.0
      %322 = vmatpush1.msra.mxu0 %v291
      %323 = vmatprep.subr.mxu0 0.0
      %324 = vmatpush1.msra.mxu0 %v292
      %325 = vmatprep.subr.mxu0 0.0
      %326 = vmatpush1.msra.mxu0 0.0
      %327 = vmatprep.subr.mxu0 0.0
      %328 = vmatpush1.msra.mxu0 0.0
      %329 = vmatprep.subr.mxu0 0.0
      %330 = vmatpush1.msra.mxu0 0.0
      %331 = vmatprep.subr.mxu0 0.0
      %332 = vmatpush1.msra.mxu0 0.0
      %333 = vmatprep.subr.mxu0 0.0
      %334 = vmatpush1.msra.mxu0 0.0
      %335 = vmatprep.subr.mxu0 0.0
      %336 = vmatpush1.msra.mxu0 0.0
      %337 = vmatprep.subr.mxu0 0.0
      %338 = vmatpush1.msra.mxu0 0.0
      %339 = vmatprep.subr.mxu0 0.0
      %340 = vmatpush1.msra.mxu0 0.0
      %341 = vmatprep.subr.mxu0 0.0
      %342 = vmatpush1.msra.mxu0 0.0
      %343 = vmatprep.subr.mxu0 0.0
      %344 = vmatpush1.msra.mxu0 0.0
      %345 = vmatprep.subr.mxu0 0.0
      %346 = vmatpush1.msra.mxu0 0.0
      %347 = vmatprep.subr.mxu0 0.0
      %348 = vmatpush1.msra.mxu0 0.0
      %349 = vmatprep.subr.mxu0 0.0
      %350 = vmatpush1.msra.mxu0 0.0
      %351 = vmatprep.subr.mxu0 0.0
      %352 = vmatpush1.msra.mxu0 0.0
      %353 = vmatprep.subr.mxu0 0.0
      %354 = vmatpush1.msra.mxu0 0.0
      %355 = vmatprep.subr.mxu0 0.0
      %356 = vmatpush1.msra.mxu0 0.0
      %357 = vmatprep.mubr.f32.mxu0 0.0
      %358 = vmatmul.mubr.f32.gmra.mrb[0].mxu0 %v273
      %v359 = vpop.f32.mrb[0].mxu0
      %v360 = vadd.f32 0.0, %v359
      %v361 = vpop.f32.mrb[0].mxu0
      %362 = vmatprep.mubr.f32.mxu0 0.0
      %363 = vmatmul.mubr.f32.gmra.mrb[0].mxu0 %v274
      %v364 = vpop.f32.mrb[0].mxu0
      %v365 = vadd.f32 0.0, %v364
      %v366 = vpop.f32.mrb[0].mxu0
      %367 = vmatprep.mubr.f32.mxu0 0.0
      %368 = vmatmul.mubr.f32.gmra.mrb[0].mxu0 %v275
      %v369 = vpop.f32.mrb[0].mxu0
      %v370 = vadd.f32 0.0, %v369
      %v371 = vpop.f32.mrb[0].mxu0
      %372 = vmatprep.mubr.f32.mxu0 0.0
      %373 = vmatmul.mubr.f32.gmra.mrb[0].mxu0 %v276
      %v374 = vpop.f32.mrb[0].mxu0
      %v375 = vadd.f32 0.0, %v374
      %v376 = vpop.f32.mrb[0].mxu0
      %377 = vdwg.mxu0
      %v378 = vld [vmem:[%s2] sm:$0xff]
      %v379 = vld [vmem:[%s2 + $0x8] sm:$0xff]
      %v380 = vld [vmem:[%s3] sm:$0x1]
      %v382 = vlaneseq
      %v383 = vshrl.u32 %v382, 7
      %v384 = vsub.s32 0, %v383
      %v385 = vrot.slane %v380, %v384
      %vm387 = vcmask 130048
      %v389 = vsel %vm387, %v360, 0
      %v392 = vsel %vm387, %v365, 0
      %v395 = vsel %vm387, %v370, 0
      %v398 = vsel %vm387, %v375, 0
      %400 = vmatprep.subr.mxu0 0.0
      %401 = vmatpush1.msra.mxu0 %v378
      %402 = vmatprep.subr.mxu0 0.0
      %403 = vmatpush1.msra.mxu0 %v379
      %404 = vmatprep.subr.mxu0 0.0
      %405 = vmatpush1.msra.mxu0 0.0
      %406 = vmatprep.subr.mxu0 0.0
      %407 = vmatpush1.msra.mxu0 0.0
      %408 = vmatprep.subr.mxu0 0.0
      %409 = vmatpush1.msra.mxu0 0.0
      %410 = vmatprep.subr.mxu0 0.0
      %411 = vmatpush1.msra.mxu0 0.0
      %412 = vmatprep.subr.mxu0 0.0
      %413 = vmatpush1.msra.mxu0 0.0
      %414 = vmatprep.subr.mxu0 0.0
      %415 = vmatpush1.msra.mxu0 0.0
      %416 = vmatprep.subr.mxu0 0.0
      %417 = vmatpush1.msra.mxu0 0.0
      %418 = vmatprep.subr.mxu0 0.0
      %419 = vmatpush1.msra.mxu0 0.0
      %420 = vmatprep.subr.mxu0 0.0
      %421 = vmatpush1.msra.mxu0 0.0
      %422 = vmatprep.subr.mxu0 0.0
      %423 = vmatpush1.msra.mxu0 0.0
      %424 = vmatprep.subr.mxu0 0.0
      %425 = vmatpush1.msra.mxu0 0.0
      %426 = vmatprep.subr.mxu0 0.0
      %427 = vmatpush1.msra.mxu0 0.0
      %428 = vmatprep.subr.mxu0 0.0
      %429 = vmatpush1.msra.mxu0 0.0
      %430 = vmatprep.subr.mxu0 0.0
      %431 = vmatpush1.msra.mxu0 0.0
      %432 = vmatprep.subr.mxu0 0.0
      %433 = vmatpush1.msra.mxu0 0.0
      %434 = vmatprep.subr.mxu0 0.0
      %435 = vmatpush1.msra.mxu0 0.0
      %436 = vmatprep.subr.mxu0 0.0
      %437 = vmatpush1.msra.mxu0 0.0
      %438 = vmatprep.subr.mxu0 0.0
      %439 = vmatpush1.msra.mxu0 0.0
      %440 = vmatprep.subr.mxu0 0.0
      %441 = vmatpush1.msra.mxu0 0.0
      %442 = vmatprep.subr.mxu0 0.0
      %443 = vmatpush1.msra.mxu0 0.0
      %444 = vmatprep.subr.mxu0 0.0
      %445 = vmatpush1.msra.mxu0 0.0
      %446 = vmatprep.subr.mxu0 0.0
      %447 = vmatpush1.msra.mxu0 0.0
      %448 = vmatprep.subr.mxu0 0.0
      %449 = vmatpush1.msra.mxu0 0.0
      %450 = vmatprep.subr.mxu0 0.0
      %451 = vmatpush1.msra.mxu0 0.0
      %452 = vmatprep.subr.mxu0 0.0
      %453 = vmatpush1.msra.mxu0 0.0
      %454 = vmatprep.subr.mxu0 0.0
      %455 = vmatpush1.msra.mxu0 0.0
      %456 = vmatprep.subr.mxu0 0.0
      %457 = vmatpush1.msra.mxu0 0.0
      %458 = vmatprep.subr.mxu0 0.0
      %459 = vmatpush1.msra.mxu0 0.0
      %460 = vmatprep.subr.mxu0 0.0
      %461 = vmatpush1.msra.mxu0 0.0
      %462 = vmatprep.subr.mxu0 0.0
      %463 = vmatpush1.msra.mxu0 0.0
      %464 = vmatprep.mubr.f32.mxu0 0.0
      %465 = vmatmul.mubr.f32.gmra.mrb[0].mxu0 %v389
      %v466 = vpop.f32.mrb[0].mxu0
      %v467 = vadd.f32 %v385, %v466
      %v468 = vpop.f32.mrb[0].mxu0
      %469 = vmatprep.mubr.f32.mxu0 0.0
      %470 = vmatmul.mubr.f32.gmra.mrb[0].mxu0 %v392
      %v471 = vpop.f32.mrb[0].mxu0
      %v472 = vadd.f32 %v385, %v471
      %v473 = vpop.f32.mrb[0].mxu0
      %474 = vmatprep.mubr.f32.mxu0 0.0
      %475 = vmatmul.mubr.f32.gmra.mrb[0].mxu0 %v395
      %v476 = vpop.f32.mrb[0].mxu0
      %v477 = vadd.f32 %v385, %v476
      %v478 = vpop.f32.mrb[0].mxu0
      %479 = vmatprep.mubr.f32.mxu0 0.0
      %480 = vmatmul.mubr.f32.gmra.mrb[0].mxu0 %v398
      %v481 = vpop.f32.mrb[0].mxu0
      %v482 = vadd.f32 %v385, %v481
      %v483 = vpop.f32.mrb[0].mxu0
      %484 = vdwg.mxu0
      %v485 = vmax.f32 %v467, 0.0
      %v486 = vmax.f32 %v472, 0.0
      %v487 = vmax.f32 %v477, 0.0
      %v488 = vmax.f32 %v482, 0.0
      %vm489 = vcmask 261120
      %490 = vst.msk [vmem:[%s261] sm:$0xff] %vm489, %v485
      %491 = vst.msk [vmem:[%s261 + $0x8] sm:$0xff] %vm489, %v486
      %492 = vst.msk [vmem:[%s261 + $0x10] sm:$0xff] %vm489, %v487
      %493 = vst.msk [vmem:[%s261 + $0x18] sm:$0xff] %vm489, %v488
      %v494 = vld [vmem:[%s4] sm:$0xff]
      %v495 = vld [vmem:[%s4 + $0x8] sm:$0xff]
      %v496 = vld [vmem:[%s4 + $0x10] sm:$0xff]
      %v497 = vld [vmem:[%s4 + $0x18] sm:$0xff]
      %v499 = vsel %vm489, %v485, 0
      %v502 = vsel %vm489, %v486, 0
      %v505 = vsel %vm489, %v487, 0
      %v508 = vsel %vm489, %v488, 0
      %510 = vmatprep.subr.mxu0 0.0
      %511 = vmatpush1.msra.mxu0 %v494
      %512 = vmatprep.subr.mxu0 0.0
      %513 = vmatpush1.msra.mxu0 %v495
      %514 = vmatprep.subr.mxu0 0.0
      %515 = vmatpush1.msra.mxu0 %v496
      %516 = vmatprep.subr.mxu0 0.0
      %517 = vmatpush1.msra.mxu0 %v497
      %518 = vmatprep.subr.mxu0 0.0
      %519 = vmatpush1.msra.mxu0 0.0
      %520 = vmatprep.subr.mxu0 0.0
      %521 = vmatpush1.msra.mxu0 0.0
      %522 = vmatprep.subr.mxu0 0.0
      %523 = vmatpush1.msra.mxu0 0.0
      %524 = vmatprep.subr.mxu0 0.0
      %525 = vmatpush1.msra.mxu0 0.0
      %526 = vmatprep.subr.mxu0 0.0
      %527 = vmatpush1.msra.mxu0 0.0
      %528 = vmatprep.subr.mxu0 0.0
      %529 = vmatpush1.msra.mxu0 0.0
      %530 = vmatprep.subr.mxu0 0.0
      %531 = vmatpush1.msra.mxu0 0.0
      %532 = vmatprep.subr.mxu0 0.0
      %533 = vmatpush1.msra.mxu0 0.0
      %534 = vmatprep.subr.mxu0 0.0
      %535 = vmatpush1.msra.mxu0 0.0
      %536 = vmatprep.subr.mxu0 0.0
      %537 = vmatpush1.msra.mxu0 0.0
      %538 = vmatprep.subr.mxu0 0.0
      %539 = vmatpush1.msra.mxu0 0.0
      %540 = vmatprep.subr.mxu0 0.0
      %541 = vmatpush1.msra.mxu0 0.0
      %542 = vmatprep.subr.mxu0 0.0
      %543 = vmatpush1.msra.mxu0 0.0
      %544 = vmatprep.subr.mxu0 0.0
      %545 = vmatpush1.msra.mxu0 0.0
      %546 = vmatprep.subr.mxu0 0.0
      %547 = vmatpush1.msra.mxu0 0.0
      %548 = vmatprep.subr.mxu0 0.0
      %549 = vmatpush1.msra.mxu0 0.0
      %550 = vmatprep.subr.mxu0 0.0
      %551 = vmatpush1.msra.mxu0 0.0
      %552 = vmatprep.subr.mxu0 0.0
      %553 = vmatpush1.msra.mxu0 0.0
      %554 = vmatprep.subr.mxu0 0.0
      %555 = vmatpush1.msra.mxu0 0.0
      %556 = vmatprep.subr.mxu0 0.0
      %557 = vmatpush1.msra.mxu0 0.0
      %558 = vmatprep.subr.mxu0 0.0
      %559 = vmatpush1.msra.mxu0 0.0
      %560 = vmatprep.subr.mxu0 0.0
      %561 = vmatpush1.msra.mxu0 0.0
      %562 = vmatprep.subr.mxu0 0.0
      %563 = vmatpush1.msra.mxu0 0.0
      %564 = vmatprep.subr.mxu0 0.0
      %565 = vmatpush1.msra.mxu0 0.0
      %566 = vmatprep.subr.mxu0 0.0
      %567 = vmatpush1.msra.mxu0 0.0
      %568 = vmatprep.subr.mxu0 0.0
      %569 = vmatpush1.msra.mxu0 0.0
      %570 = vmatprep.subr.mxu0 0.0
      %571 = vmatpush1.msra.mxu0 0.0
      %572 = vmatprep.subr.mxu0 0.0
      %573 = vmatpush1.msra.mxu0 0.0
      %574 = vmatprep.mubr.f32.mxu0 0.0
      %575 = vmatmul.mubr.f32.gmra.mrb[0].mxu0 %v499
      %v576 = vpop.f32.mrb[0].mxu0
      %v577 = vadd.f32 0.0, %v576
      %v578 = vpop.f32.mrb[0].mxu0
      %579 = vmatprep.mubr.f32.mxu0 0.0
      %580 = vmatmul.mubr.f32.gmra.mrb[0].mxu0 %v502
      %v581 = vpop.f32.mrb[0].mxu0
      %v582 = vadd.f32 0.0, %v581
      %v583 = vpop.f32.mrb[0].mxu0
      %584 = vmatprep.mubr.f32.mxu0 0.0
      %585 = vmatmul.mubr.f32.gmra.mrb[0].mxu0 %v505
      %v586 = vpop.f32.mrb[0].mxu0
      %v587 = vadd.f32 0.0, %v586
      %v588 = vpop.f32.mrb[0].mxu0
      %589 = vmatprep.mubr.f32.mxu0 0.0
      %590 = vmatmul.mubr.f32.gmra.mrb[0].mxu0 %v508
      %v591 = vpop.f32.mrb[0].mxu0
      %v592 = vadd.f32 0.0, %v591
      %v593 = vpop.f32.mrb[0].mxu0
      %594 = vdwg.mxu0
      %595 = vst.msk [vmem:[%s267] sm:$0xff] %vm489, %v577
      %596 = vst.msk [vmem:[%s267 + $0x8] sm:$0xff] %vm489, %v582
      %597 = vst.msk [vmem:[%s267 + $0x10] sm:$0xff] %vm489, %v587
      %598 = vst.msk [vmem:[%s267 + $0x18] sm:$0xff] %vm489, %v592
      %s599 = smul.u32 4, %s18
      %p600 = scmp.lt.s32.totalorder %s599, 15
      %s601 = scalar_select %p600, %s599, 15
      %s602 = smul.addr %s601, 8
      %s603 = scalar_lea.vmem %s5, %s602
      %s604 = smul.u32 4, %s18
      %p605 = scmp.lt.s32.totalorder %s604, 15
      %s606 = scalar_select %p605, %s604, 15
      %s607 = smul.addr %s606, 8
      %s608 = scalar_lea.vmem %s6, %s607
      // Predicated region
      $region41: #{gcn_synthetic_forward.3} parent=39 // pred_check
        %p609 = pneg %p146
      $region42: #{gcn_synthetic_forward.3} parent=39 // pred_check_branch
        %611 = sbr.rel (%p609) target = $region44
      $region43: #{gcn_synthetic_forward.3} parent=39 // pred_region
        %s612 = smul.u32 4, %s18
      $region44: #{gcn_synthetic_forward.3} parent=39 // pred_fallthru
        _
      // Predicated region
      $region45: #{gcn_synthetic_forward.3} parent=39 // pred_check
        %p613 = pneg %p172
      $region46: #{gcn_synthetic_forward.3} parent=39 // pred_check_branch
        %615 = sbr.rel (%p613) target = $region48
      $region47: #{gcn_synthetic_forward.3} parent=39 // pred_region
        %s616 = smul.u32 4, %s18
      $region48: #{gcn_synthetic_forward.3} parent=39 // pred_fallthru
        _
    $region40: #{gcn_synthetic_forward.3} parent=5 // pred_fallthru
      _
    %p617 = scmp.le.s32.totalorder 2, %s13
    // Predicated region
    $region49: #{gcn_synthetic_forward.3} parent=5 // pred_check
      %p618 = pneg %p617
    $region50: #{gcn_synthetic_forward.3} parent=5 // pred_check_branch
      %620 = sbr.rel (%p618) target = $region52
    $region51: #{gcn_synthetic_forward.3} parent=5 // pred_region
      %s621 = ssub.s32 %s13, 2
      // Predicated region
      $region53: #{gcn_synthetic_forward.3} parent=51 // pred_check
        %p622 = pneg %p152
      $region54: #{gcn_synthetic_forward.3} parent=51 // pred_check_branch
        %624 = sbr.rel (%p622) target = $region56
      $region55: #{gcn_synthetic_forward.3} parent=51 // pred_region
        %s625 = smul.u32 4, %s19
        %p626 = scmp.lt.s32.totalorder %s625, 15
        %s627 = scalar_select %p626, %s625, 15
        %s628 = smul.addr %s627, 8
        %s629 = scalar_lea.vmem %s5, %s628
      $region56: #{gcn_synthetic_forward.3} parent=51 // pred_fallthru
        _
      // Predicated region
      $region57: #{gcn_synthetic_forward.3} parent=51 // pred_check
        %p630 = pneg %p178
      $region58: #{gcn_synthetic_forward.3} parent=51 // pred_check_branch
        %632 = sbr.rel (%p630) target = $region60
      $region59: #{gcn_synthetic_forward.3} parent=51 // pred_region
        %s633 = smul.u32 4, %s19
        %p634 = scmp.lt.s32.totalorder %s633, 15
        %s635 = scalar_select %p634, %s633, 15
        %s636 = smul.addr %s635, 8
        %s637 = scalar_lea.vmem %s6, %s636
      $region60: #{gcn_synthetic_forward.3} parent=51 // pred_fallthru
        _
    $region52: #{gcn_synthetic_forward.3} parent=5 // pred_fallthru
      _
  $region6: #{gcn_synthetic_forward.3} parent=0 // loop_footer
    %s17 = sadd.s32 1, %s13
  $region7: #{gcn_synthetic_forward.3} parent=0 // loop_footer_branch
    %12 = sbr.rel target = $region3
  $region8: #{gcn_synthetic_forward.3} parent=0 // loop_exit
    _

// kernel: gcn_synthetic_forward.4
$region0: #{gcn_synthetic_forward.4}
  #allocation0 [shape = 'u32[]', space=smem, size = 0x4, offset = 0x4, fixed_abs, tag = 'smem constant byte address 0x4 - core index']
  #allocation1 [shape = 'u32[144,128]{1,0:T(1,128)}', space=vmem, size = 0x12000, scoped, tag = 'internal scratch']
  %s0 = inlined_call_operand.vmem [shape: bf16[128,128], index: 0, kind: input, shape index: {}]
  %s1 = inlined_call_operand.vmem [shape: f32[128,32], index: 1, kind: input, shape index: {}]
  %s2 = inlined_call_operand.vmem [shape: f32[1,32], index: 2, kind: input, shape index: {}]
  %s3 = inlined_call_operand.vmem [shape: f32[32,16], index: 3, kind: input, shape index: {}]
  %s4 = inlined_call_operand.vmem [shape: f32[128,32], index: 4, kind: output, shape index: {0}]
  %s5 = inlined_call_operand.vmem [shape: f32[128,16], index: 5, kind: output, shape index: {1}]
  %6 = xla_tuple %s4, %s5
  %s7 = sld [smem:[#allocation0]]
  $region57: #{gcn_synthetic_forward.4} parent=0
    _
  %s9 = ssub.s32 1, %s7
  %s10 = scalar_select 0, %s9, %s7
  loop: start=0, step=1, limit=6
  $region2: #{gcn_synthetic_forward.4} parent=0 // loop_pre_header
    _
  $region3: #{gcn_synthetic_forward.4} parent=0 // loop_header
    %s12 = sphi 0, %s16
    %p13 = scmp.ge.s32.totalorder %s12, 6
    %s22 = sphi 0, %s24
    %s25 = sphi 0, %s22
    %s26 = sphi 0, %s25
    %s42 = sphi 0, %s26
    %s46 = sphi 0, %s46
    %s48 = sphi 0, %s46
    %s49 = sphi 0, %s48
    %s63 = sphi 0, %s49
    %s67 = sphi 0, %s67
    %s69 = sphi 0, %s67
    %s70 = sphi 0, %s69
    %s84 = sphi 0, %s70
    %s88 = sphi 0, %s88
    %s90 = sphi 0, %s88
    %s91 = sphi 0, %s90
    %s105 = sphi 0, %s91
    %s111 = sphi 0, %s113
    %s114 = sphi 0, %s111
    %s115 = sphi 0, %s114
    %s131 = sphi 0, %s115
    %s137 = sphi 0, %s139
    %s140 = sphi 0, %s137
    %s141 = sphi 0, %s140
    %s157 = sphi 0, %s141
  $region4: #{gcn_synthetic_forward.4} parent=0 // loop_header_branch
    %15 = sbr.rel (%p13) target = $region8
  $region5: #{gcn_synthetic_forward.4} parent=0 // loop_body
    %s17 = ssub.s32 %s12, 1
    %s18 = ssub.s32 %s12, 2
    %s19 = sadd.s32 %s12, 1
    %s20 = ssub.s32 %s12, %s19
    %p21 = scmp.eq.s32.totalorder %s20, 0
    %s23 = sadd.s32 %s22, 1
    %s24 = scalar_select %p21, %s22, %s23
    %p27 = pneg %p21
    %p28 = scmp.eq.s32.totalorder %s12, 3
    %p29 = por %p27, %p28
    %p30 = scmp.ne.s32.totalorder %s22, %s25
    %p31 = scmp.eq.s32.totalorder %s12, 0
    %p32 = por %p30, %p31
    %p33 = scmp.ne.s32.totalorder %s22, %s25
    %p34 = scmp.eq.s32.totalorder %s17, 3
    %p35 = por %p33, %p34
    %p36 = scmp.ne.s32.totalorder %s25, %s26
    %p37 = scmp.eq.s32.totalorder %s17, 0
    %p38 = por %p36, %p37
    %p39 = scmp.ne.s32.totalorder %s25, %s26
    %p40 = scmp.eq.s32.totalorder %s18, 3
    %p41 = por %p39, %p40
    %p43 = scmp.ne.s32.totalorder %s26, %s42
    %p44 = scmp.eq.s32.totalorder %s18, 0
    %p45 = por %p43, %p44
    %s47 = sadd.s32 %s46, 1
    %p50 = scmp.eq.s32.totalorder %s12, 3
    %p51 = scmp.ne.s32.totalorder %s46, %s48
    %p52 = scmp.eq.s32.totalorder %s12, 0
    %p53 = por %p51, %p52
    %p54 = scmp.ne.s32.totalorder %s46, %s48
    %p55 = scmp.eq.s32.totalorder %s17, 3
    %p56 = por %p54, %p55
    %p57 = scmp.ne.s32.totalorder %s48, %s49
    %p58 = scmp.eq.s32.totalorder %s17, 0
    %p59 = por %p57, %p58
    %p60 = scmp.ne.s32.totalorder %s48, %s49
    %p61 = scmp.eq.s32.totalorder %s18, 3
    %p62 = por %p60, %p61
    %p64 = scmp.ne.s32.totalorder %s49, %s63
    %p65 = scmp.eq.s32.totalorder %s18, 0
    %p66 = por %p64, %p65
    %s68 = sadd.s32 %s67, 1
    %p71 = scmp.eq.s32.totalorder %s12, 3
    %p72 = scmp.ne.s32.totalorder %s67, %s69
    %p73 = scmp.eq.s32.totalorder %s12, 0
    %p74 = por %p72, %p73
    %p75 = scmp.ne.s32.totalorder %s67, %s69
    %p76 = scmp.eq.s32.totalorder %s17, 3
    %p77 = por %p75, %p76
    %p78 = scmp.ne.s32.totalorder %s69, %s70
    %p79 = scmp.eq.s32.totalorder %s17, 0
    %p80 = por %p78, %p79
    %p81 = scmp.ne.s32.totalorder %s69, %s70
    %p82 = scmp.eq.s32.totalorder %s18, 3
    %p83 = por %p81, %p82
    %p85 = scmp.ne.s32.totalorder %s70, %s84
    %p86 = scmp.eq.s32.totalorder %s18, 0
    %p87 = por %p85, %p86
    %s89 = sadd.s32 %s88, 1
    %p92 = scmp.eq.s32.totalorder %s12, 3
    %p93 = scmp.ne.s32.totalorder %s88, %s90
    %p94 = scmp.eq.s32.totalorder %s12, 0
    %p95 = por %p93, %p94
    %p96 = scmp.ne.s32.totalorder %s88, %s90
    %p97 = scmp.eq.s32.totalorder %s17, 3
    %p98 = por %p96, %p97
    %p99 = scmp.ne.s32.totalorder %s90, %s91
    %p100 = scmp.eq.s32.totalorder %s17, 0
    %p101 = por %p99, %p100
    %p102 = scmp.ne.s32.totalorder %s90, %s91
    %p103 = scmp.eq.s32.totalorder %s18, 3
    %p104 = por %p102, %p103
    %p106 = scmp.ne.s32.totalorder %s91, %s105
    %p107 = scmp.eq.s32.totalorder %s18, 0
    %p108 = por %p106, %p107
    %s109 = ssub.s32 %s12, %s19
    %p110 = scmp.eq.s32.totalorder %s109, 0
    %s112 = sadd.s32 %s111, 1
    %s113 = scalar_select %p110, %s111, %s112
    %p116 = pneg %p110
    %p117 = scmp.eq.s32.totalorder %s12, 3
    %p118 = por %p116, %p117
    %p119 = scmp.ne.s32.totalorder %s111, %s114
    %p120 = scmp.eq.s32.totalorder %s12, 0
    %p121 = por %p119, %p120
    %p122 = scmp.ne.s32.totalorder %s111, %s114
    %p123 = scmp.eq.s32.totalorder %s17, 3
    %p124 = por %p122, %p123
    %p125 = scmp.ne.s32.totalorder %s114, %s115
    %p126 = scmp.eq.s32.totalorder %s17, 0
    %p127 = por %p125, %p126
    %p128 = scmp.ne.s32.totalorder %s114, %s115
    %p129 = scmp.eq.s32.totalorder %s18, 3
    %p130 = por %p128, %p129
    %p132 = scmp.ne.s32.totalorder %s115, %s131
    %p133 = scmp.eq.s32.totalorder %s18, 0
    %p134 = por %p132, %p133
    %s135 = ssub.s32 %s12, %s19
    %p136 = scmp.eq.s32.totalorder %s135, 0
    %s138 = sadd.s32 %s137, 1
    %s139 = scalar_select %p136, %s137, %s138
    %p142 = pneg %p136
    %p143 = scmp.eq.s32.totalorder %s12, 3
    %p144 = por %p142, %p143
    %p145 = scmp.ne.s32.totalorder %s137, %s140
    %p146 = scmp.eq.s32.totalorder %s12, 0
    %p147 = por %p145, %p146
    %p148 = scmp.ne.s32.totalorder %s137, %s140
    %p149 = scmp.eq.s32.totalorder %s17, 3
    %p150 = por %p148, %p149
    %p151 = scmp.ne.s32.totalorder %s140, %s141
    %p152 = scmp.eq.s32.totalorder %s17, 0
    %p153 = por %p151, %p152
    %p154 = scmp.ne.s32.totalorder %s140, %s141
    %p155 = scmp.eq.s32.totalorder %s18, 3
    %p156 = por %p154, %p155
    %p158 = scmp.ne.s32.totalorder %s141, %s157
    %p159 = scmp.eq.s32.totalorder %s18, 0
    %p160 = por %p158, %p159
    %p161 = scmp.le.s32.totalorder 1, %s12
    %p162 = scmp.lt.s32.totalorder %s12, 5
    %p163 = pnand %p161, %p162
    %p164 = pneg %p163
    // Predicated region
    $region9: #{gcn_synthetic_forward.4} parent=5 // pred_check
      _
    $region10: #{gcn_synthetic_forward.4} parent=5 // pred_check_branch
      %166 = sbr.rel (%p163) target = $region12
    $region11: #{gcn_synthetic_forward.4} parent=5 // pred_region
      %s167 = ssub.s32 %s12, 1
      // Predicated region
      $region13: #{gcn_synthetic_forward.4} parent=11 // pred_check
        %p168 = pneg %p59
      $region14: #{gcn_synthetic_forward.4} parent=11 // pred_check_branch
        %170 = sbr.rel (%p168) target = $region16
      $region15: #{gcn_synthetic_forward.4} parent=11 // pred_region
        _
      $region16: #{gcn_synthetic_forward.4} parent=11 // pred_fallthru
        _
      // Predicated region
      $region17: #{gcn_synthetic_forward.4} parent=11 // pred_check
        %p171 = pneg %p80
      $region18: #{gcn_synthetic_forward.4} parent=11 // pred_check_branch
        %173 = sbr.rel (%p171) target = $region20
      $region19: #{gcn_synthetic_forward.4} parent=11 // pred_region
        _
      $region20: #{gcn_synthetic_forward.4} parent=11 // pred_fallthru
        _
      // Predicated region
      $region21: #{gcn_synthetic_forward.4} parent=11 // pred_check
        %p174 = pneg %p101
      $region22: #{gcn_synthetic_forward.4} parent=11 // pred_check_branch
        %176 = sbr.rel (%p174) target = $region24
      $region23: #{gcn_synthetic_forward.4} parent=11 // pred_region
        _
      $region24: #{gcn_synthetic_forward.4} parent=11 // pred_fallthru
        _
    $region12: #{gcn_synthetic_forward.4} parent=5 // pred_fallthru
      _
    %p177 = scmp.lt.s32.totalorder %s12, 4
    // Predicated region
    $region25: #{gcn_synthetic_forward.4} parent=5 // pred_check
      %p178 = pneg %p177
    $region26: #{gcn_synthetic_forward.4} parent=5 // pred_check_branch
      %180 = sbr.rel (%p178) target = $region28
    $region27: #{gcn_synthetic_forward.4} parent=5 // pred_region
      // Predicated region
      $region29: #{gcn_synthetic_forward.4} parent=27 // pred_check
        %p181 = pneg %p32
      $region30: #{gcn_synthetic_forward.4} parent=27 // pred_check_branch
        %183 = sbr.rel (%p181) target = $region32
      $region31: #{gcn_synthetic_forward.4} parent=27 // pred_region
        %s184 = smul.u32 4, %s12
        %p185 = scmp.lt.s32.totalorder %s184, 15
        %s186 = scalar_select %p185, %s184, 15
        %s187 = smul.addr %s186, 4
        %s188 = scalar_lea.vmem %s0, %s187
        %s189 = smul.u32 4, %s12
      $region32: #{gcn_synthetic_forward.4} parent=27 // pred_fallthru
        _
    $region28: #{gcn_synthetic_forward.4} parent=5 // pred_fallthru
      _
    %p190 = scmp.le.s32.totalorder 1, %s12
    %p191 = scmp.lt.s32.totalorder %s12, 5
    %p192 = pnand %p190, %p191
    %p193 = pneg %p192
    // Predicated region
    $region33: #{gcn_synthetic_forward.4} parent=5 // pred_check
      _
    $region34: #{gcn_synthetic_forward.4} parent=5 // pred_check_branch
      %195 = sbr.rel (%p192) target = $region36
    $region35: #{gcn_synthetic_forward.4} parent=5 // pred_region
      %s196 = ssub.s32 %s12, 1
      %s197 = smul.u32 4, %s17
      %p198 = scmp.lt.s32.totalorder %s197, 15
      %s199 = scalar_select %p198, %s197, 15
      %s200 = smul.addr %s199, 4
      %s201 = scalar_lea.vmem %s0, %s200
      %p202 = pneg %p38
      %p203 = pneg %p35
      %p204 = pneg %p59
      %p205 = pneg %p56
      %p206 = pneg %p80
      %p207 = pneg %p77
      %p208 = pneg %p101
      %p209 = pneg %p98
      %p210 = pneg %p127
      %p211 = pneg %p124
      %s212 = smul.u32 4, %s17
      %p213 = scmp.lt.s32.totalorder %s212, 15
      %s214 = scalar_select %p213, %s212, 15
      %s215 = smul.addr %s214, 8
      %s216 = scalar_lea.vmem %s4, %s215
      %p217 = pneg %p153
      %p218 = pneg %p150
      %s219 = smul.u32 4, %s17
      %p220 = scmp.lt.s32.totalorder %s219, 15
      %s221 = scalar_select %p220, %s219, 15
      %s222 = smul.addr %s221, 8
      %s223 = scalar_lea.vmem %s5, %s222
      %s224 = smul.u32 4, %s17
      %p225 = scmp.lt.s32.totalorder %s224, 15
      %s226 = scalar_select %p225, %s224, 15
      %s227 = smul.addr %s226, 4
      %s228 = scalar_lea.vmem %s0, %s227
      %s229 = smul.u32 4, %s17
      %s230 = smul.u32 4, %s17
      %p231 = scmp.lt.s32.totalorder %s230, 15
      %s232 = scalar_select %p231, %s230, 15
      %s233 = smul.addr %s232, 8
      %s234 = scalar_lea.vmem %s4, %s233
      %s235 = smul.u32 4, %s17
      %s236 = smul.u32 4, %s17
      %p237 = scmp.lt.s32.totalorder %s236, 15
      %s238 = scalar_select %p237, %s236, 15
      %s239 = smul.addr %s238, 8
      %s240 = scalar_lea.vmem %s5, %s239
      %s241 = smul.u32 4, %s17
      %v242 = vld [vmem:[%s228] sm:$0xf]
      %v243 = vld [vmem:[%s228 + $0x4] sm:$0xf]
      %v244 = vld [vmem:[%s228 + $0x8] sm:$0xf]
      %v245 = vld [vmem:[%s228 + $0xc] sm:$0xf]
      %v246 = vunpack.c.l.bf16 %v242
      %v247 = vunpack.c.l.bf16 %v243
      %v248 = vunpack.c.l.bf16 %v244
      %v249 = vunpack.c.l.bf16 %v245
      %v250 = vld [vmem:[%s1] sm:$0xff]
      %v251 = vld [vmem:[%s1 + $0x8] sm:$0xff]
      %v252 = vld [vmem:[%s1 + $0x10] sm:$0xff]
      %v253 = vld [vmem:[%s1 + $0x18] sm:$0xff]
      %v254 = vld [vmem:[%s1 + $0x20] sm:$0xff]
      %v255 = vld [vmem:[%s1 + $0x28] sm:$0xff]
      %v256 = vld [vmem:[%s1 + $0x30] sm:$0xff]
      %v257 = vld [vmem:[%s1 + $0x38] sm:$0xff]
      %v258 = vld [vmem:[%s1 + $0x40] sm:$0xff]
      %v259 = vld [vmem:[%s1 + $0x48] sm:$0xff]
      %v260 = vld [vmem:[%s1 + $0x50] sm:$0xff]
      %v261 = vld [vmem:[%s1 + $0x58] sm:$0xff]
      %v262 = vld [vmem:[%s1 + $0x60] sm:$0xff]
      %v263 = vld [vmem:[%s1 + $0x68] sm:$0xff]
      %v264 = vld [vmem:[%s1 + $0x70] sm:$0xff]
      %v265 = vld [vmem:[%s1 + $0x78] sm:$0xff]
      %v266 = vld [vmem:[%s2] sm:$0x1]
      %v268 = vlaneseq
      %v269 = vshrl.u32 %v268, 7
      %v270 = vsub.s32 0, %v269
      %v271 = vrot.slane %v266, %v270
      %273 = vmatprep.subr.mxu0 0.0
      %274 = vmatpush1.msra.mxu0 %v250
      %275 = vmatprep.subr.mxu0 0.0
      %276 = vmatpush1.msra.mxu0 %v251
      %277 = vmatprep.subr.mxu0 0.0
      %278 = vmatpush1.msra.mxu0 %v252
      %279 = vmatprep.subr.mxu0 0.0
      %280 = vmatpush1.msra.mxu0 %v253
      %281 = vmatprep.subr.mxu0 0.0
      %282 = vmatpush1.msra.mxu0 %v254
      %283 = vmatprep.subr.mxu0 0.0
      %284 = vmatpush1.msra.mxu0 %v255
      %285 = vmatprep.subr.mxu0 0.0
      %286 = vmatpush1.msra.mxu0 %v256
      %287 = vmatprep.subr.mxu0 0.0
      %288 = vmatpush1.msra.mxu0 %v257
      %289 = vmatprep.subr.mxu0 0.0
      %290 = vmatpush1.msra.mxu0 %v258
      %291 = vmatprep.subr.mxu0 0.0
      %292 = vmatpush1.msra.mxu0 %v259
      %293 = vmatprep.subr.mxu0 0.0
      %294 = vmatpush1.msra.mxu0 %v260
      %295 = vmatprep.subr.mxu0 0.0
      %296 = vmatpush1.msra.mxu0 %v261
      %297 = vmatprep.subr.mxu0 0.0
      %298 = vmatpush1.msra.mxu0 %v262
      %299 = vmatprep.subr.mxu0 0.0
      %300 = vmatpush1.msra.mxu0 %v263
      %301 = vmatprep.subr.mxu0 0.0
      %302 = vmatpush1.msra.mxu0 %v264
      %303 = vmatprep.subr.mxu0 0.0
      %304 = vmatpush1.msra.mxu0 %v265
      %305 = vmatprep.subr.mxu0 0.0
      %306 = vmatpush1.msra.mxu0 0.0
      %307 = vmatprep.subr.mxu0 0.0
      %308 = vmatpush1.msra.mxu0 0.0
      %309 = vmatprep.subr.mxu0 0.0
      %310 = vmatpush1.msra.mxu0 0.0
      %311 = vmatprep.subr.mxu0 0.0
      %312 = vmatpush1.msra.mxu0 0.0
      %313 = vmatprep.subr.mxu0 0.0
      %314 = vmatpush1.msra.mxu0 0.0
      %315 = vmatprep.subr.mxu0 0.0
      %316 = vmatpush1.msra.mxu0 0.0
      %317 = vmatprep.subr.mxu0 0.0
      %318 = vmatpush1.msra.mxu0 0.0
      %319 = vmatprep.subr.mxu0 0.0
      %320 = vmatpush1.msra.mxu0 0.0
      %321 = vmatprep.subr.mxu0 0.0
      %322 = vmatpush1.msra.mxu0 0.0
      %323 = vmatprep.subr.mxu0 0.0
      %324 = vmatpush1.msra.mxu0 0.0
      %325 = vmatprep.subr.mxu0 0.0
      %326 = vmatpush1.msra.mxu0 0.0
      %327 = vmatprep.subr.mxu0 0.0
      %328 = vmatpush1.msra.mxu0 0.0
      %329 = vmatprep.subr.mxu0 0.0
      %330 = vmatpush1.msra.mxu0 0.0
      %331 = vmatprep.subr.mxu0 0.0
      %332 = vmatpush1.msra.mxu0 0.0
      %333 = vmatprep.subr.mxu0 0.0
      %334 = vmatpush1.msra.mxu0 0.0
      %335 = vmatprep.subr.mxu0 0.0
      %336 = vmatpush1.msra.mxu0 0.0
      %337 = vmatprep.mubr.f32.mxu0 0.0
      %338 = vmatmul.mubr.f32.gmra.mrb[0].mxu0 %v246
      %v339 = vpop.f32.mrb[0].mxu0
      %v340 = vadd.f32 %v271, %v339
      %v341 = vpop.f32.mrb[0].mxu0
      %342 = vmatprep.mubr.f32.mxu0 0.0
      %343 = vmatmul.mubr.f32.gmra.mrb[0].mxu0 %v247
      %v344 = vpop.f32.mrb[0].mxu0
      %v345 = vadd.f32 %v271, %v344
      %v346 = vpop.f32.mrb[0].mxu0
      %347 = vmatprep.mubr.f32.mxu0 0.0
      %348 = vmatmul.mubr.f32.gmra.mrb[0].mxu0 %v248
      %v349 = vpop.f32.mrb[0].mxu0
      %v350 = vadd.f32 %v271, %v349
      %v351 = vpop.f32.mrb[0].mxu0
      %352 = vmatprep.mubr.f32.mxu0 0.0
      %353 = vmatmul.mubr.f32.gmra.mrb[0].mxu0 %v249
      %v354 = vpop.f32.mrb[0].mxu0
      %v355 = vadd.f32 %v271, %v354
      %v356 = vpop.f32.mrb[0].mxu0
      %357 = vdwg.mxu0
      %v358 = vmax.f32 %v340, 0.0
      %v359 = vmax.f32 %v345, 0.0
      %v360 = vmax.f32 %v350, 0.0
      %v361 = vmax.f32 %v355, 0.0
      %vm362 = vcmask 261120
      %363 = vst.msk [vmem:[%s234] sm:$0xff] %vm362, %v358
      %364 = vst.msk [vmem:[%s234 + $0x8] sm:$0xff] %vm362, %v359
      %365 = vst.msk [vmem:[%s234 + $0x10] sm:$0xff] %vm362, %v360
      %366 = vst.msk [vmem:[%s234 + $0x18] sm:$0xff] %vm362, %v361
      %v367 = vld [vmem:[%s3] sm:$0xff]
      %v368 = vld [vmem:[%s3 + $0x8] sm:$0xff]
      %v369 = vld [vmem:[%s3 + $0x10] sm:$0xff]
      %v370 = vld [vmem:[%s3 + $0x18] sm:$0xff]
      %v372 = vsel %vm362, %v358, 0
      %v375 = vsel %vm362, %v359, 0
      %v378 = vsel %vm362, %v360, 0
      %v381 = vsel %vm362, %v361, 0
      %383 = vmatprep.subr.mxu0 0.0
      %384 = vmatpush1.msra.mxu0 %v367
      %385 = vmatprep.subr.mxu0 0.0
      %386 = vmatpush1.msra.mxu0 %v368
      %387 = vmatprep.subr.mxu0 0.0
      %388 = vmatpush1.msra.mxu0 %v369
      %389 = vmatprep.subr.mxu0 0.0
      %390 = vmatpush1.msra.mxu0 %v370
      %391 = vmatprep.subr.mxu0 0.0
      %392 = vmatpush1.msra.mxu0 0.0
      %393 = vmatprep.subr.mxu0 0.0
      %394 = vmatpush1.msra.mxu0 0.0
      %395 = vmatprep.subr.mxu0 0.0
      %396 = vmatpush1.msra.mxu0 0.0
      %397 = vmatprep.subr.mxu0 0.0
      %398 = vmatpush1.msra.mxu0 0.0
      %399 = vmatprep.subr.mxu0 0.0
      %400 = vmatpush1.msra.mxu0 0.0
      %401 = vmatprep.subr.mxu0 0.0
      %402 = vmatpush1.msra.mxu0 0.0
      %403 = vmatprep.subr.mxu0 0.0
      %404 = vmatpush1.msra.mxu0 0.0
      %405 = vmatprep.subr.mxu0 0.0
      %406 = vmatpush1.msra.mxu0 0.0
      %407 = vmatprep.subr.mxu0 0.0
      %408 = vmatpush1.msra.mxu0 0.0
      %409 = vmatprep.subr.mxu0 0.0
      %410 = vmatpush1.msra.mxu0 0.0
      %411 = vmatprep.subr.mxu0 0.0
      %412 = vmatpush1.msra.mxu0 0.0
      %413 = vmatprep.subr.mxu0 0.0
      %414 = vmatpush1.msra.mxu0 0.0
      %415 = vmatprep.subr.mxu0 0.0
      %416 = vmatpush1.msra.mxu0 0.0
      %417 = vmatprep.subr.mxu0 0.0
      %418 = vmatpush1.msra.mxu0 0.0
      %419 = vmatprep.subr.mxu0 0.0
      %420 = vmatpush1.msra.mxu0 0.0
      %421 = vmatprep.subr.mxu0 0.0
      %422 = vmatpush1.msra.mxu0 0.0
      %423 = vmatprep.subr.mxu0 0.0
      %424 = vmatpush1.msra.mxu0 0.0
      %425 = vmatprep.subr.mxu0 0.0
      %426 = vmatpush1.msra.mxu0 0.0
      %427 = vmatprep.subr.mxu0 0.0
      %428 = vmatpush1.msra.mxu0 0.0
      %429 = vmatprep.subr.mxu0 0.0
      %430 = vmatpush1.msra.mxu0 0.0
      %431 = vmatprep.subr.mxu0 0.0
      %432 = vmatpush1.msra.mxu0 0.0
      %433 = vmatprep.subr.mxu0 0.0
      %434 = vmatpush1.msra.mxu0 0.0
      %435 = vmatprep.subr.mxu0 0.0
      %436 = vmatpush1.msra.mxu0 0.0
      %437 = vmatprep.subr.mxu0 0.0
      %438 = vmatpush1.msra.mxu0 0.0
      %439 = vmatprep.subr.mxu0 0.0
      %440 = vmatpush1.msra.mxu0 0.0
      %441 = vmatprep.subr.mxu0 0.0
      %442 = vmatpush1.msra.mxu0 0.0
      %443 = vmatprep.subr.mxu0 0.0
      %444 = vmatpush1.msra.mxu0 0.0
      %445 = vmatprep.subr.mxu0 0.0
      %446 = vmatpush1.msra.mxu0 0.0
      %447 = vmatprep.mubr.f32.mxu0 0.0
      %448 = vmatmul.mubr.f32.gmra.mrb[0].mxu0 %v372
      %v449 = vpop.f32.mrb[0].mxu0
      %v450 = vadd.f32 0.0, %v449
      %v451 = vpop.f32.mrb[0].mxu0
      %452 = vmatprep.mubr.f32.mxu0 0.0
      %453 = vmatmul.mubr.f32.gmra.mrb[0].mxu0 %v375
      %v454 = vpop.f32.mrb[0].mxu0
      %v455 = vadd.f32 0.0, %v454
      %v456 = vpop.f32.mrb[0].mxu0
      %457 = vmatprep.mubr.f32.mxu0 0.0
      %458 = vmatmul.mubr.f32.gmra.mrb[0].mxu0 %v378
      %v459 = vpop.f32.mrb[0].mxu0
      %v460 = vadd.f32 0.0, %v459
      %v461 = vpop.f32.mrb[0].mxu0
      %462 = vmatprep.mubr.f32.mxu0 0.0
      %463 = vmatmul.mubr.f32.gmra.mrb[0].mxu0 %v381
      %v464 = vpop.f32.mrb[0].mxu0
      %v465 = vadd.f32 0.0, %v464
      %v466 = vpop.f32.mrb[0].mxu0
      %467 = vdwg.mxu0
      %vm468 = vcmask 130048
      %469 = vst.msk [vmem:[%s240] sm:$0xff] %vm468, %v450
      %470 = vst.msk [vmem:[%s240 + $0x8] sm:$0xff] %vm468, %v455
      %471 = vst.msk [vmem:[%s240 + $0x10] sm:$0xff] %vm468, %v460
      %472 = vst.msk [vmem:[%s240 + $0x18] sm:$0xff] %vm468, %v465
      %s473 = smul.u32 4, %s17
      %p474 = scmp.lt.s32.totalorder %s473, 15
      %s475 = scalar_select %p474, %s473, 15
      %s476 = smul.addr %s475, 8
      %s477 = scalar_lea.vmem %s4, %s476
      %s478 = smul.u32 4, %s17
      %p479 = scmp.lt.s32.totalorder %s478, 15
      %s480 = scalar_select %p479, %s478, 15
      %s481 = smul.addr %s480, 8
      %s482 = scalar_lea.vmem %s5, %s481
      // Predicated region
      $region37: #{gcn_synthetic_forward.4} parent=35 // pred_check
        %p483 = pneg %p124
      $region38: #{gcn_synthetic_forward.4} parent=35 // pred_check_branch
        %485 = sbr.rel (%p483) target = $region40
      $region39: #{gcn_synthetic_forward.4} parent=35 // pred_region
        %s486 = smul.u32 4, %s17
      $region40: #{gcn_synthetic_forward.4} parent=35 // pred_fallthru
        _
      // Predicated region
      $region41: #{gcn_synthetic_forward.4} parent=35 // pred_check
        %p487 = pneg %p150
      $region42: #{gcn_synthetic_forward.4} parent=35 // pred_check_branch
        %489 = sbr.rel (%p487) target = $region44
      $region43: #{gcn_synthetic_forward.4} parent=35 // pred_region
        %s490 = smul.u32 4, %s17
      $region44: #{gcn_synthetic_forward.4} parent=35 // pred_fallthru
        _
    $region36: #{gcn_synthetic_forward.4} parent=5 // pred_fallthru
      _
    %p491 = scmp.le.s32.totalorder 2, %s12
    // Predicated region
    $region45: #{gcn_synthetic_forward.4} parent=5 // pred_check
      %p492 = pneg %p491
    $region46: #{gcn_synthetic_forward.4} parent=5 // pred_check_branch
      %494 = sbr.rel (%p492) target = $region48
    $region47: #{gcn_synthetic_forward.4} parent=5 // pred_region
      %s495 = ssub.s32 %s12, 2
      // Predicated region
      $region49: #{gcn_synthetic_forward.4} parent=47 // pred_check
        %p496 = pneg %p130
      $region50: #{gcn_synthetic_forward.4} parent=47 // pred_check_branch
        %498 = sbr.rel (%p496) target = $region52
      $region51: #{gcn_synthetic_forward.4} parent=47 // pred_region
        %s499 = smul.u32 4, %s18
        %p500 = scmp.lt.s32.totalorder %s499, 15
        %s501 = scalar_select %p500, %s499, 15
        %s502 = smul.addr %s501, 8
        %s503 = scalar_lea.vmem %s4, %s502
      $region52: #{gcn_synthetic_forward.4} parent=47 // pred_fallthru
        _
      // Predicated region
      $region53: #{gcn_synthetic_forward.4} parent=47 // pred_check
        %p504 = pneg %p156
      $region54: #{gcn_synthetic_forward.4} parent=47 // pred_check_branch
        %506 = sbr.rel (%p504) target = $region56
      $region55: #{gcn_synthetic_forward.4} parent=47 // pred_region
        %s507 = smul.u32 4, %s18
        %p508 = scmp.lt.s32.totalorder %s507, 15
        %s509 = scalar_select %p508, %s507, 15
        %s510 = smul.addr %s509, 8
        %s511 = scalar_lea.vmem %s5, %s510
      $region56: #{gcn_synthetic_forward.4} parent=47 // pred_fallthru
        _
    $region48: #{gcn_synthetic_forward.4} parent=5 // pred_fallthru
      _
  $region6: #{gcn_synthetic_forward.4} parent=0 // loop_footer
    %s16 = sadd.s32 1, %s12
  $region7: #{gcn_synthetic_forward.4} parent=0 // loop_footer_branch
    %11 = sbr.rel target = $region3
  $region8: #{gcn_synthetic_forward.4} parent=0 // loop_exit
    _

</llo_original>
